<compile_context>
chip_gen: v5e
topology: v5e:2x2
jax: 0.10.0
libtpu: 0.0.40
codegen_flags: <defaults>
</compile_context>

<pallas_src>
import functools

import jax
import jax.numpy as jnp
from jax import lax
from jax.experimental import pallas as pl
from jax.experimental.pallas import tpu as pltpu


def _round_up(x, m):
    return ((x + m - 1) // m) * m


# ----------------------------- Pallas kernels ------------------------------

def _matmul_bias_kernel(a_ref, b_ref, bias_ref, o_ref):
    o_ref[...] = (jnp.dot(a_ref[...], b_ref[...],
                          preferred_element_type=jnp.float32)
                  + bias_ref[...])


def matmul_bias(a, b, bias, tm=512):
    """a: (M, K), b: (K, N), bias: (N,) -> (M, N) f32.
    bf16 MXU operands, f32 accumulation, bias fused in the epilogue."""
    M, K = a.shape
    _, N = b.shape
    tm = min(tm, _round_up(M, 8))
    return pl.pallas_call(
        _matmul_bias_kernel,
        out_shape=jax.ShapeDtypeStruct((M, N), jnp.float32),
        grid=(pl.cdiv(M, tm),),
        in_specs=[pl.BlockSpec((tm, K), lambda i: (i, 0)),
                  pl.BlockSpec((K, N), lambda i: (0, 0)),
                  pl.BlockSpec((1, N), lambda i: (0, 0))],
        out_specs=pl.BlockSpec((tm, N), lambda i: (i, 0)),
        compiler_params=pltpu.CompilerParams(
            dimension_semantics=("parallel",)),
    )(a.astype(jnp.bfloat16), b.astype(jnp.bfloat16),
      bias.reshape(1, N).astype(jnp.float32))


def _instnorm_res_kernel(x_ref, r_ref, o_ref):
    # InstanceNorm (affine=False, eps=1e-8, biased variance) + residual add.
    x = x_ref[...]
    inv_n = 1.0 / x.shape[1]
    mean = jnp.sum(x, axis=1, keepdims=True) * inv_n
    d = x - mean
    var = jnp.sum(d * d, axis=1, keepdims=True) * inv_n
    o_ref[...] = d * lax.rsqrt(var + 1e-8) + r_ref[...]


def instnorm_res(x, res, tr=256):
    """x, res: (R, L).  Normalize each row over its L lanes, add residual."""
    R, L = x.shape
    tr = min(tr, _round_up(R, 8))
    return pl.pallas_call(
        _instnorm_res_kernel,
        out_shape=jax.ShapeDtypeStruct((R, L), jnp.float32),
        grid=(pl.cdiv(R, tr),),
        in_specs=[pl.BlockSpec((tr, L), lambda i: (i, 0)),
                  pl.BlockSpec((tr, L), lambda i: (i, 0))],
        out_specs=pl.BlockSpec((tr, L), lambda i: (i, 0)),
        compiler_params=pltpu.CompilerParams(
            dimension_semantics=("parallel",)),
    )(x.astype(jnp.float32), res.astype(jnp.float32))


def _lstm_kernel(gx_ref, whh_ref, o_ref, h_ref, c_ref, *, ndir, hidden):
    # gx_ref: (T, tn, ndir*4H) = x@W_ih^T + b (time-major, all gates fused;
    #         for ndir=2 the backward half is already time-reversed).
    # whh_ref: (ndir*H, ndir*4H) block-diagonal recurrent weight (bf16).
    # One fused MXU dot per timestep; h/c kept in f32 VMEM scratch.
    H = hidden
    h_ref[...] = jnp.zeros_like(h_ref)
    c_ref[...] = jnp.zeros_like(c_ref)
    T = gx_ref.shape[0]

    def step(t, carry):
        h = h_ref[...]
        gates = gx_ref[t] + jnp.dot(h.astype(whh_ref.dtype), whh_ref[...],
                                    preferred_element_type=jnp.float32)
        for d in range(ndir):  # static unroll (1 or 2)
            g = gates[:, d * 4 * H:(d + 1) * 4 * H]
            i = jax.nn.sigmoid(g[:, 0 * H:1 * H])
            f = jax.nn.sigmoid(g[:, 1 * H:2 * H])
            gg = jnp.tanh(g[:, 2 * H:3 * H])
            o = jax.nn.sigmoid(g[:, 3 * H:4 * H])
            c_new = f * c_ref[:, d * H:(d + 1) * H] + i * gg
            c_ref[:, d * H:(d + 1) * H] = c_new
            h_ref[:, d * H:(d + 1) * H] = o * jnp.tanh(c_new)
        o_ref[t] = h_ref[...]
        return carry

    lax.fori_loop(0, T, step, 0)


def lstm_scan(gx, whh, *, ndir, hidden):
    """gx: (T, N, ndir*4H) f32; whh: (ndir*H, ndir*4H).
    Returns (T, N, ndir*H) f32 (backward direction in reversed time order)."""
    T, N, G = gx.shape
    HD = ndir * hidden
    tn = min(256, _round_up(N, 8))
    kernel = functools.partial(_lstm_kernel, ndir=ndir, hidden=hidden)
    return pl.pallas_call(
        kernel,
        out_shape=jax.ShapeDtypeStruct((T, N, HD), jnp.float32),
        grid=(pl.cdiv(N, tn),),
        in_specs=[pl.BlockSpec((T, tn, G), lambda i: (0, i, 0)),
                  pl.BlockSpec((HD, G), lambda i: (0, 0))],
        out_specs=pl.BlockSpec((T, tn, HD), lambda i: (0, i, 0)),
        scratch_shapes=[pltpu.VMEM((tn, HD), jnp.float32),   # h
                        pltpu.VMEM((tn, HD), jnp.float32)],  # c
        compiler_params=pltpu.CompilerParams(
            dimension_semantics=("parallel",)),
    )(gx.astype(jnp.float32), whh.astype(jnp.bfloat16))


# ------------------------------ glue helpers --------------------------------

def _block_diag(a, b):
    top = jnp.concatenate([a, jnp.zeros((a.shape[0], b.shape[1]), a.dtype)], 1)
    bot = jnp.concatenate([jnp.zeros((b.shape[0], a.shape[1]), b.dtype), b], 1)
    return jnp.concatenate([top, bot], axis=0)


# --------------------------------- model ------------------------------------

def dprnn_forward(p, x):
    """DPRNN forward.  x: (B, C, T, F) with C = numUnits = channel, F = width.
    Returns (B, C, T, F)."""
    B, C, T, F = x.shape
    H2 = C // 2
    x = x.astype(jnp.float32)
    xp = jnp.transpose(x, (0, 2, 3, 1))                       # (B, T, F, C)

    # ---------------- intra path (bidirectional LSTM over F) ----------------
    # Fused input projection for both directions: one matmul, bias in epilogue.
    w_in = jnp.concatenate([p['intra_w_ih_f'], p['intra_w_ih_b']], axis=0).T
    b_in = jnp.concatenate([p['intra_b_ih_f'] + p['intra_b_hh_f'],
                            p['intra_b_ih_b'] + p['intra_b_hh_b']], axis=0)
    gx = matmul_bias(xp.reshape(B * T * F, C), w_in, b_in)    # (B*T*F, 8*H2)
    gx = gx.reshape(B * T, F, 8 * H2).transpose(1, 0, 2)      # (F, B*T, 8*H2)
    # Backward direction consumes reversed time.
    gx = jnp.concatenate([gx[:, :, :4 * H2], gx[::-1, :, 4 * H2:]], axis=-1)
    whh_intra = _block_diag(p['intra_w_hh_f'].T, p['intra_w_hh_b'].T)  # (2H2, 8H2)
    out = lstm_scan(gx, whh_intra, ndir=2, hidden=H2)         # (F, B*T, 2*H2)
    # Un-reverse the backward half -> PyTorch [fwd, bwd] concat per position.
    intra_lstm = jnp.concatenate([out[:, :, :H2], out[::-1, :, H2:]], axis=-1)
    intra_lstm = intra_lstm.transpose(1, 0, 2)                # (B*T, F, C)

    fc = matmul_bias(intra_lstm.reshape(B * T * F, C),
                     p['intra_fc_w'].T, p['intra_fc_b'])
    fc = fc.reshape(B, T, F, C).transpose(0, 2, 1, 3)         # (B, F, T, C)
    # InstanceNorm2d(width) on (B, F, T, C): per (b, f) over (T, C);
    # residual (= x in that layout) fused into the norm kernel.
    res = xp.transpose(0, 2, 1, 3)                            # (B, F, T, C)
    intra_out = instnorm_res(fc.reshape(B * F, T * C),
                             res.reshape(B * F, T * C)).reshape(B, F, T, C)

    # ---------------- inter path (unidirectional LSTM over T) ---------------
    gx2 = matmul_bias(intra_out.reshape(B * F * T, C),
                      p['inter_w_ih'].T,
                      p['inter_b_ih'] + p['inter_b_hh'])      # (B*F*T, 4C)
    gx2 = gx2.reshape(B * F, T, 4 * C).transpose(1, 0, 2)     # (T, B*F, 4C)
    out2 = lstm_scan(gx2, p['inter_w_hh'].T, ndir=1, hidden=C)  # (T, B*F, C)
    inter_lstm = out2.transpose(1, 0, 2)                      # (B*F, T, C)

    fc2 = matmul_bias(inter_lstm.reshape(B * F * T, C),
                      p['inter_fc_w'].T, p['inter_fc_b'])
    fc2 = fc2.reshape(B, F, T, C).transpose(0, 3, 2, 1)       # (B, C, T, F)
    # InstanceNorm2d(channel) on (B, C, T, F): per (b, c) over (T, F);
    # final residual fused -> result is already in the output layout.
    res2 = intra_out.transpose(0, 3, 2, 1)                    # (B, C, T, F)
    out_final = instnorm_res(fc2.reshape(B * C, T * F),
                             res2.reshape(B * C, T * F)).reshape(B, C, T, F)
    return out_final


# ------------------------------ parameters ----------------------------------

def init_params(key, num_units):
    C = num_units
    H2 = C // 2
    keys = iter(jax.random.split(key, 32))

    def rnd(shape, scale=0.1):
        return jax.random.normal(next(keys), shape, jnp.float32) * scale

    p = {}
    for d in ('f', 'b'):                      # bidirectional intra LSTM
        p[f'intra_w_ih_{d}'] = rnd((4 * H2, C))
        p[f'intra_w_hh_{d}'] = rnd((4 * H2, H2))
        p[f'intra_b_ih_{d}'] = rnd((4 * H2,), 0.01)
        p[f'intra_b_hh_{d}'] = rnd((4 * H2,), 0.01)
    p['intra_fc_w'] = rnd((C, C))
    p['intra_fc_b'] = rnd((C,), 0.01)
    p['inter_w_ih'] = rnd((4 * C, C))         # unidirectional inter LSTM
    p['inter_w_hh'] = rnd((4 * C, C))
    p['inter_b_ih'] = rnd((4 * C,), 0.01)
    p['inter_b_hh'] = rnd((4 * C,), 0.01)
    p['inter_fc_w'] = rnd((C, C))
    p['inter_fc_b'] = rnd((C,), 0.01)
    return p


# --------------------------------- main --------------------------------------

if __name__ == "__main__":
    # DPRNN(numUnits=64, width=16, channel=64), input (B, channel, T, width).
    B, C, T, F = 2, 64, 8, 16
    params = init_params(jax.random.PRNGKey(0), num_units=C)
    x = jax.random.normal(jax.random.PRNGKey(0), (B, C, T, F), jnp.float32)

    fwd = jax.jit(dprnn_forward)
    out = jax.block_until_ready(fwd(params, x))

    assert out.shape == (B, C, T, F), out.shape
    assert bool(jnp.all(jnp.isfinite(out)))
    print("KERNEL_OK")
</pallas_src>

<mosaic_0001>
module attributes {stable_mosaic.version = 11 : i64} {
  func.func @_matmul_bias_kernel(%arg0: i32, %arg1: memref<256x64xbf16, #tpu.memory_space<vmem>>, %arg2: memref<64x256xbf16, #tpu.memory_space<vmem>>, %arg3: memref<1x256xf32, #tpu.memory_space<vmem>>, %arg4: memref<256x256xf32, #tpu.memory_space<vmem>>) attributes {dimension_semantics = [#tpu.dimension_semantics<parallel>], iteration_bounds = array<i64: 1>, scalar_prefetch = 0 : i64, scratch_operands = 0 : i64, tpu.core_type = #tpu.core_type<tc>, window_params = [{transform_indices = @transform_0, window_bounds = array<i64: 256, 64>}, {pipeline_mode = #tpu.pipeline_mode<synchronous>, transform_indices = @transform_1, window_bounds = array<i64: 64, 256>}, {pipeline_mode = #tpu.pipeline_mode<synchronous>, transform_indices = @transform_2, window_bounds = array<i64: 1, 256>}, {transform_indices = @transform_3, window_bounds = array<i64: 256, 256>}]} {
    %c0 = arith.constant 0 : index
    %c0_0 = arith.constant 0 : index
    %0 = vector.load %arg1[%c0, %c0_0] : memref<256x64xbf16, #tpu.memory_space<vmem>>, vector<256x64xbf16>
    %c0_1 = arith.constant 0 : index
    %c0_2 = arith.constant 0 : index
    %1 = vector.load %arg2[%c0_1, %c0_2] : memref<64x256xbf16, #tpu.memory_space<vmem>>, vector<64x256xbf16>
    %cst = arith.constant dense<0.000000e+00> : vector<256x256xf32>
    %2 = tpu.matmul %0, %1, %cst {dimension_numbers = #tpu.dot_dimension_numbers<[1], [0], [0], [1], [0, 0, 1, 1], [], []>} : vector<256x64xbf16>, vector<64x256xbf16>, vector<256x256xf32> -> vector<256x256xf32>
    %c0_3 = arith.constant 0 : index
    %c0_4 = arith.constant 0 : index
    %3 = vector.load %arg3[%c0_3, %c0_4] : memref<1x256xf32, #tpu.memory_space<vmem>>, vector<1x256xf32>
    %4 = vector.broadcast %3 : vector<1x256xf32> to vector<256x256xf32>
    %5 = arith.addf %2, %4 : vector<256x256xf32>
    %c0_5 = arith.constant 0 : index
    %c0_6 = arith.constant 0 : index
    %6 = vector.load %arg4[%c0_5, %c0_6] : memref<256x256xf32, #tpu.memory_space<vmem>>, vector<256x256xf32>
    tpu.vector_store %arg4[%c0_5, %c0_6], %5 {strides = array<i32>} : memref<256x256xf32, #tpu.memory_space<vmem>>, vector<256x256xf32>,
    return
  }
  func.func @transform_0(%arg0: i32) -> (i32, i32) {
    %c0_i32 = arith.constant 0 : i32
    %c0_i32_0 = arith.constant 0 : i32
    return %arg0, %c0_i32 : i32, i32
  }
  func.func @transform_1(%arg0: i32) -> (i32, i32) {
    %c0_i32 = arith.constant 0 : i32
    %c0_i32_0 = arith.constant 0 : i32
    %c0_i32_1 = arith.constant 0 : i32
    return %c0_i32, %c0_i32_0 : i32, i32
  }
  func.func @transform_2(%arg0: i32) -> (i32, i32) {
    %c0_i32 = arith.constant 0 : i32
    %c0_i32_0 = arith.constant 0 : i32
    %c0_i32_1 = arith.constant 0 : i32
    return %c0_i32, %c0_i32_0 : i32, i32
  }
  func.func @transform_3(%arg0: i32) -> (i32, i32) {
    %c0_i32 = arith.constant 0 : i32
    %c0_i32_0 = arith.constant 0 : i32
    return %arg0, %c0_i32 : i32, i32
  }
}

module attributes {stable_mosaic.version = 11 : i64} {
  func.func @_lstm_kernel(%arg0: i32, %arg1: memref<16x16x256xf32, #tpu.memory_space<vmem>>, %arg2: memref<64x256xbf16, #tpu.memory_space<vmem>>, %arg3: memref<16x16x64xf32, #tpu.memory_space<vmem>>, %arg4: memref<16x64xf32, #tpu.memory_space<vmem>>, %arg5: memref<16x64xf32, #tpu.memory_space<vmem>>) attributes {dimension_semantics = [#tpu.dimension_semantics<parallel>], iteration_bounds = array<i64: 1>, scalar_prefetch = 0 : i64, scratch_operands = 2 : i64, tpu.core_type = #tpu.core_type<tc>, window_params = [{transform_indices = @transform_0, window_bounds = array<i64: 16, 16, 256>}, {pipeline_mode = #tpu.pipeline_mode<synchronous>, transform_indices = @transform_1, window_bounds = array<i64: 64, 256>}, {transform_indices = @transform_2, window_bounds = array<i64: 16, 16, 64>}]} {
    %cst = arith.constant 0.000000e+00 : f32
    %0 = vector.broadcast %cst : f32 to vector<16x64xf32>
    %c0 = arith.constant 0 : index
    %c0_0 = arith.constant 0 : index
    %1 = vector.load %arg4[%c0, %c0_0] : memref<16x64xf32, #tpu.memory_space<vmem>>, vector<16x64xf32>
    tpu.vector_store %arg4[%c0, %c0_0], %0 {strides = array<i32>} : memref<16x64xf32, #tpu.memory_space<vmem>>, vector<16x64xf32>,
    %cst_1 = arith.constant 0.000000e+00 : f32
    %2 = vector.broadcast %cst_1 : f32 to vector<16x64xf32>
    %c0_2 = arith.constant 0 : index
    %c0_3 = arith.constant 0 : index
    %3 = vector.load %arg5[%c0_2, %c0_3] : memref<16x64xf32, #tpu.memory_space<vmem>>, vector<16x64xf32>
    tpu.vector_store %arg5[%c0_2, %c0_3], %2 {strides = array<i32>} : memref<16x64xf32, #tpu.memory_space<vmem>>, vector<16x64xf32>,
    %c0_i32 = arith.constant 0 : i32
    %c16_i32 = arith.constant 16 : i32
    %4 = arith.addi %c0_i32, %c16_i32 : i32
    %c1_i32 = arith.constant 1 : i32
    scf.for %arg6 = %c0_i32 to %4 step %c1_i32  : i32 {
      %c0_5 = arith.constant 0 : index
      %c0_6 = arith.constant 0 : index
      %5 = vector.load %arg4[%c0_5, %c0_6] : memref<16x64xf32, #tpu.memory_space<vmem>>, vector<16x64xf32>
      %6 = arith.index_cast %arg6 : i32 to index
      %c0_7 = arith.constant 0 : index
      %c0_8 = arith.constant 0 : index
      %7 = vector.load %arg1[%6, %c0_7, %c0_8] : memref<16x16x256xf32, #tpu.memory_space<vmem>>, vector<1x16x256xf32>
      %8 = vector.shape_cast %7 : vector<1x16x256xf32> to vector<16x256xf32>
      %9 = arith.truncf %5 : vector<16x64xf32> to vector<16x64xbf16>
      %c0_9 = arith.constant 0 : index
      %c0_10 = arith.constant 0 : index
      %10 = vector.load %arg2[%c0_9, %c0_10] : memref<64x256xbf16, #tpu.memory_space<vmem>>, vector<64x256xbf16>
      %cst_11 = arith.constant dense<0.000000e+00> : vector<16x256xf32>
      %11 = tpu.matmul %9, %10, %cst_11 {dimension_numbers = #tpu.dot_dimension_numbers<[1], [0], [0], [1], [0, 0, 1, 1], [], []>} : vector<16x64xbf16>, vector<64x256xbf16>, vector<16x256xf32> -> vector<16x256xf32>
      %12 = arith.addf %8, %11 : vector<16x256xf32>
      %13 = vector.extract_strided_slice %12 {offsets = [0, 0], sizes = [16, 128], strides = [1, 1]} : vector<16x256xf32> to vector<16x128xf32>
      %14 = vector.extract_strided_slice %13 {offsets = [0, 0], sizes = [16, 32], strides = [1, 1]} : vector<16x128xf32> to vector<16x32xf32>
      %15 = arith.negf %14 : vector<16x32xf32>
      %16 = math.exp %15 : vector<16x32xf32>
      %cst_12 = arith.constant 1.000000e+00 : f32
      %17 = vector.broadcast %cst_12 : f32 to vector<16x32xf32>
      %18 = arith.addf %17, %16 : vector<16x32xf32>
      %19 = arith.divf %17, %18 : vector<16x32xf32>
      %20 = vector.extract_strided_slice %13 {offsets = [0, 32], sizes = [16, 32], strides = [1, 1]} : vector<16x128xf32> to vector<16x32xf32>
      %21 = arith.negf %20 : vector<16x32xf32>
      %22 = math.exp %21 : vector<16x32xf32>
      %cst_13 = arith.constant 1.000000e+00 : f32
      %23 = vector.broadcast %cst_13 : f32 to vector<16x32xf32>
      %24 = arith.addf %23, %22 : vector<16x32xf32>
      %25 = arith.divf %23, %24 : vector<16x32xf32>
      %26 = vector.extract_strided_slice %13 {offsets = [0, 64], sizes = [16, 32], strides = [1, 1]} : vector<16x128xf32> to vector<16x32xf32>
      %27 = math.tanh %26 : vector<16x32xf32>
      %28 = vector.extract_strided_slice %13 {offsets = [0, 96], sizes = [16, 32], strides = [1, 1]} : vector<16x128xf32> to vector<16x32xf32>
      %29 = arith.negf %28 : vector<16x32xf32>
      %30 = math.exp %29 : vector<16x32xf32>
      %cst_14 = arith.constant 1.000000e+00 : f32
      %31 = vector.broadcast %cst_14 : f32 to vector<16x32xf32>
      %32 = arith.addf %31, %30 : vector<16x32xf32>
      %33 = arith.divf %31, %32 : vector<16x32xf32>
      %c0_15 = arith.constant 0 : index
      %c0_16 = arith.constant 0 : index
      %34 = vector.load %arg5[%c0_15, %c0_16] : memref<16x64xf32, #tpu.memory_space<vmem>>, vector<16x32xf32>
      %35 = arith.mulf %25, %34 : vector<16x32xf32>
      %36 = arith.mulf %19, %27 : vector<16x32xf32>
      %37 = arith.addf %35, %36 : vector<16x32xf32>
      %c0_17 = arith.constant 0 : index
      %c0_18 = arith.constant 0 : index
      %38 = vector.load %arg5[%c0_17, %c0_18] : memref<16x64xf32, #tpu.memory_space<vmem>>, vector<16x32xf32>
      tpu.vector_store %arg5[%c0_17, %c0_18], %37 {strides = array<i32>} : memref<16x64xf32, #tpu.memory_space<vmem>>, vector<16x32xf32>,
      %39 = math.tanh %37 : vector<16x32xf32>
      %40 = arith.mulf %33, %39 : vector<16x32xf32>
      %c0_19 = arith.constant 0 : index
      %c0_20 = arith.constant 0 : index
      %41 = vector.load %arg4[%c0_19, %c0_20] : memref<16x64xf32, #tpu.memory_space<vmem>>, vector<16x32xf32>
      tpu.vector_store %arg4[%c0_19, %c0_20], %40 {strides = array<i32>} : memref<16x64xf32, #tpu.memory_space<vmem>>, vector<16x32xf32>,
      %42 = vector.extract_strided_slice %12 {offsets = [0, 128], sizes = [16, 128], strides = [1, 1]} : vector<16x256xf32> to vector<16x128xf32>
      %43 = vector.extract_strided_slice %42 {offsets = [0, 0], sizes = [16, 32], strides = [1, 1]} : vector<16x128xf32> to vector<16x32xf32>
      %44 = arith.negf %43 : vector<16x32xf32>
      %45 = math.exp %44 : vector<16x32xf32>
      %cst_21 = arith.constant 1.000000e+00 : f32
      %46 = vector.broadcast %cst_21 : f32 to vector<16x32xf32>
      %47 = arith.addf %46, %45 : vector<16x32xf32>
      %48 = arith.divf %46, %47 : vector<16x32xf32>
      %49 = vector.extract_strided_slice %42 {offsets = [0, 32], sizes = [16, 32], strides = [1, 1]} : vector<16x128xf32> to vector<16x32xf32>
      %50 = arith.negf %49 : vector<16x32xf32>
      %51 = math.exp %50 : vector<16x32xf32>
      %cst_22 = arith.constant 1.000000e+00 : f32
      %52 = vector.broadcast %cst_22 : f32 to vector<16x32xf32>
      %53 = arith.addf %52, %51 : vector<16x32xf32>
      %54 = arith.divf %52, %53 : vector<16x32xf32>
      %55 = vector.extract_strided_slice %42 {offsets = [0, 64], sizes = [16, 32], strides = [1, 1]} : vector<16x128xf32> to vector<16x32xf32>
      %56 = math.tanh %55 : vector<16x32xf32>
      %57 = vector.extract_strided_slice %42 {offsets = [0, 96], sizes = [16, 32], strides = [1, 1]} : vector<16x128xf32> to vector<16x32xf32>
      %58 = arith.negf %57 : vector<16x32xf32>
      %59 = math.exp %58 : vector<16x32xf32>
      %cst_23 = arith.constant 1.000000e+00 : f32
      %60 = vector.broadcast %cst_23 : f32 to vector<16x32xf32>
      %61 = arith.addf %60, %59 : vector<16x32xf32>
      %62 = arith.divf %60, %61 : vector<16x32xf32>
      %c0_24 = arith.constant 0 : index
      %c32 = arith.constant 32 : index
      %63 = vector.load %arg5[%c0_24, %c32] : memref<16x64xf32, #tpu.memory_space<vmem>>, vector<16x32xf32>
      %64 = arith.mulf %54, %63 : vector<16x32xf32>
      %65 = arith.mulf %48, %56 : vector<16x32xf32>
      %66 = arith.addf %64, %65 : vector<16x32xf32>
      %c0_25 = arith.constant 0 : index
      %c32_26 = arith.constant 32 : index
      %67 = vector.load %arg5[%c0_25, %c32_26] : memref<16x64xf32, #tpu.memory_space<vmem>>, vector<16x32xf32>
      tpu.vector_store %arg5[%c0_25, %c32_26], %66 {strides = array<i32>} : memref<16x64xf32, #tpu.memory_space<vmem>>, vector<16x32xf32>,
      %68 = math.tanh %66 : vector<16x32xf32>
      %69 = arith.mulf %62, %68 : vector<16x32xf32>
      %c0_27 = arith.constant 0 : index
      %c32_28 = arith.constant 32 : index
      %70 = vector.load %arg4[%c0_27, %c32_28] : memref<16x64xf32, #tpu.memory_space<vmem>>, vector<16x32xf32>
      tpu.vector_store %arg4[%c0_27, %c32_28], %69 {strides = array<i32>} : memref<16x64xf32, #tpu.memory_space<vmem>>, vector<16x32xf32>,
      %c0_29 = arith.constant 0 : index
      %c0_30 = arith.constant 0 : index
      %71 = vector.load %arg4[%c0_29, %c0_30] : memref<16x64xf32, #tpu.memory_space<vmem>>, vector<16x64xf32>
      %72 = arith.index_cast %arg6 : i32 to index
      %c0_31 = arith.constant 0 : index
      %c0_32 = arith.constant 0 : index
      %73 = vector.load %arg3[%72, %c0_31, %c0_32] : memref<16x16x64xf32, #tpu.memory_space<vmem>>, vector<1x16x64xf32>
      %74 = vector.shape_cast %73 : vector<1x16x64xf32> to vector<16x64xf32>
      %75 = vector.shape_cast %71 : vector<16x64xf32> to vector<1x16x64xf32>
      tpu.vector_store %arg3[%72, %c0_31, %c0_32], %75 {strides = array<i32>} : memref<16x16x64xf32, #tpu.memory_space<vmem>>, vector<1x16x64xf32>,
    }
    %c16_i32_4 = arith.constant 16 : i32
    return
  }
  func.func @transform_0(%arg0: i32) -> (i32, i32, i32) {
    %c0_i32 = arith.constant 0 : i32
    %c0_i32_0 = arith.constant 0 : i32
    %c0_i32_1 = arith.constant 0 : i32
    return %c0_i32, %arg0, %c0_i32_0 : i32, i32, i32
  }
  func.func @transform_1(%arg0: i32) -> (i32, i32) {
    %c0_i32 = arith.constant 0 : i32
    %c0_i32_0 = arith.constant 0 : i32
    %c0_i32_1 = arith.constant 0 : i32
    return %c0_i32, %c0_i32_0 : i32, i32
  }
  func.func @transform_2(%arg0: i32) -> (i32, i32, i32) {
    %c0_i32 = arith.constant 0 : i32
    %c0_i32_0 = arith.constant 0 : i32
    %c0_i32_1 = arith.constant 0 : i32
    return %c0_i32, %arg0, %c0_i32_0 : i32, i32, i32
  }
}

module attributes {stable_mosaic.version = 11 : i64} {
  func.func @_matmul_bias_kernel(%arg0: i32, %arg1: memref<256x64xbf16, #tpu.memory_space<vmem>>, %arg2: memref<64x64xbf16, #tpu.memory_space<vmem>>, %arg3: memref<1x64xf32, #tpu.memory_space<vmem>>, %arg4: memref<256x64xf32, #tpu.memory_space<vmem>>) attributes {dimension_semantics = [#tpu.dimension_semantics<parallel>], iteration_bounds = array<i64: 1>, scalar_prefetch = 0 : i64, scratch_operands = 0 : i64, tpu.core_type = #tpu.core_type<tc>, window_params = [{transform_indices = @transform_0, window_bounds = array<i64: 256, 64>}, {pipeline_mode = #tpu.pipeline_mode<synchronous>, transform_indices = @transform_1, window_bounds = array<i64: 64, 64>}, {pipeline_mode = #tpu.pipeline_mode<synchronous>, transform_indices = @transform_2, window_bounds = array<i64: 1, 64>}, {transform_indices = @transform_3, window_bounds = array<i64: 256, 64>}]} {
    %c0 = arith.constant 0 : index
    %c0_0 = arith.constant 0 : index
    %0 = vector.load %arg1[%c0, %c0_0] : memref<256x64xbf16, #tpu.memory_space<vmem>>, vector<256x64xbf16>
    %c0_1 = arith.constant 0 : index
    %c0_2 = arith.constant 0 : index
    %1 = vector.load %arg2[%c0_1, %c0_2] : memref<64x64xbf16, #tpu.memory_space<vmem>>, vector<64x64xbf16>
    %cst = arith.constant dense<0.000000e+00> : vector<256x64xf32>
    %2 = tpu.matmul %0, %1, %cst {dimension_numbers = #tpu.dot_dimension_numbers<[1], [0], [0], [1], [0, 0, 1, 1], [], []>} : vector<256x64xbf16>, vector<64x64xbf16>, vector<256x64xf32> -> vector<256x64xf32>
    %c0_3 = arith.constant 0 : index
    %c0_4 = arith.constant 0 : index
    %3 = vector.load %arg3[%c0_3, %c0_4] : memref<1x64xf32, #tpu.memory_space<vmem>>, vector<1x64xf32>
    %4 = vector.broadcast %3 : vector<1x64xf32> to vector<256x64xf32>
    %5 = arith.addf %2, %4 : vector<256x64xf32>
    %c0_5 = arith.constant 0 : index
    %c0_6 = arith.constant 0 : index
    %6 = vector.load %arg4[%c0_5, %c0_6] : memref<256x64xf32, #tpu.memory_space<vmem>>, vector<256x64xf32>
    tpu.vector_store %arg4[%c0_5, %c0_6], %5 {strides = array<i32>} : memref<256x64xf32, #tpu.memory_space<vmem>>, vector<256x64xf32>,
    return
  }
  func.func @transform_0(%arg0: i32) -> (i32, i32) {
    %c0_i32 = arith.constant 0 : i32
    %c0_i32_0 = arith.constant 0 : i32
    return %arg0, %c0_i32 : i32, i32
  }
  func.func @transform_1(%arg0: i32) -> (i32, i32) {
    %c0_i32 = arith.constant 0 : i32
    %c0_i32_0 = arith.constant 0 : i32
    %c0_i32_1 = arith.constant 0 : i32
    return %c0_i32, %c0_i32_0 : i32, i32
  }
  func.func @transform_2(%arg0: i32) -> (i32, i32) {
    %c0_i32 = arith.constant 0 : i32
    %c0_i32_0 = arith.constant 0 : i32
    %c0_i32_1 = arith.constant 0 : i32
    return %c0_i32, %c0_i32_0 : i32, i32
  }
  func.func @transform_3(%arg0: i32) -> (i32, i32) {
    %c0_i32 = arith.constant 0 : i32
    %c0_i32_0 = arith.constant 0 : i32
    return %arg0, %c0_i32 : i32, i32
  }
}

module attributes {stable_mosaic.version = 11 : i64} {
  func.func @_instnorm_res_kernel(%arg0: i32, %arg1: memref<32x512xf32, #tpu.memory_space<vmem>>, %arg2: memref<32x512xf32, #tpu.memory_space<vmem>>, %arg3: memref<32x512xf32, #tpu.memory_space<vmem>>) attributes {dimension_semantics = [#tpu.dimension_semantics<parallel>], iteration_bounds = array<i64: 1>, scalar_prefetch = 0 : i64, scratch_operands = 0 : i64, tpu.core_type = #tpu.core_type<tc>, window_params = [{transform_indices = @transform_0, window_bounds = array<i64: 32, 512>}, {transform_indices = @transform_1, window_bounds = array<i64: 32, 512>}, {transform_indices = @transform_2, window_bounds = array<i64: 32, 512>}]} {
    %c0 = arith.constant 0 : index
    %c0_0 = arith.constant 0 : index
    %0 = vector.load %arg1[%c0, %c0_0] : memref<32x512xf32, #tpu.memory_space<vmem>>, vector<32x512xf32>
    %cst = arith.constant dense<0.000000e+00> : vector<32xf32>
    %1 = vector.multi_reduction <add>, %0, %cst [1] : vector<32x512xf32> to vector<32xf32>
    %2 = vector.shape_cast %1 : vector<32xf32> to vector<32x1xf32>
    %cst_1 = arith.constant 0.001953125 : f32
    %3 = vector.broadcast %cst_1 : f32 to vector<32x1xf32>
    %4 = arith.mulf %2, %3 : vector<32x1xf32>
    %5 = vector.broadcast %4 : vector<32x1xf32> to vector<32x512xf32>
    %6 = arith.subf %0, %5 : vector<32x512xf32>
    %7 = arith.mulf %6, %6 : vector<32x512xf32>
    %cst_2 = arith.constant dense<0.000000e+00> : vector<32xf32>
    %8 = vector.multi_reduction <add>, %7, %cst_2 [1] : vector<32x512xf32> to vector<32xf32>
    %9 = vector.shape_cast %8 : vector<32xf32> to vector<32x1xf32>
    %cst_3 = arith.constant 0.001953125 : f32
    %10 = vector.broadcast %cst_3 : f32 to vector<32x1xf32>
    %11 = arith.mulf %9, %10 : vector<32x1xf32>
    %cst_4 = arith.constant 9.99999993E-9 : f32
    %12 = vector.broadcast %cst_4 : f32 to vector<32x1xf32>
    %13 = arith.addf %11, %12 : vector<32x1xf32>
    %14 = math.rsqrt %13 : vector<32x1xf32>
    %15 = vector.broadcast %14 : vector<32x1xf32> to vector<32x512xf32>
    %16 = arith.mulf %6, %15 : vector<32x512xf32>
    %c0_5 = arith.constant 0 : index
    %c0_6 = arith.constant 0 : index
    %17 = vector.load %arg2[%c0_5, %c0_6] : memref<32x512xf32, #tpu.memory_space<vmem>>, vector<32x512xf32>
    %18 = arith.addf %16, %17 : vector<32x512xf32>
    %c0_7 = arith.constant 0 : index
    %c0_8 = arith.constant 0 : index
    %19 = vector.load %arg3[%c0_7, %c0_8] : memref<32x512xf32, #tpu.memory_space<vmem>>, vector<32x512xf32>
    tpu.vector_store %arg3[%c0_7, %c0_8], %18 {strides = array<i32>} : memref<32x512xf32, #tpu.memory_space<vmem>>, vector<32x512xf32>,
    return
  }
  func.func @transform_0(%arg0: i32) -> (i32, i32) {
    %c0_i32 = arith.constant 0 : i32
    %c0_i32_0 = arith.constant 0 : i32
    return %arg0, %c0_i32 : i32, i32
  }
  func.func @transform_1(%arg0: i32) -> (i32, i32) {
    %c0_i32 = arith.constant 0 : i32
    %c0_i32_0 = arith.constant 0 : i32
    return %arg0, %c0_i32 : i32, i32
  }
  func.func @transform_2(%arg0: i32) -> (i32, i32) {
    %c0_i32 = arith.constant 0 : i32
    %c0_i32_0 = arith.constant 0 : i32
    return %arg0, %c0_i32 : i32, i32
  }
}

module attributes {stable_mosaic.version = 11 : i64} {
  func.func @_lstm_kernel(%arg0: i32, %arg1: memref<8x32x256xf32, #tpu.memory_space<vmem>>, %arg2: memref<64x256xbf16, #tpu.memory_space<vmem>>, %arg3: memref<8x32x64xf32, #tpu.memory_space<vmem>>, %arg4: memref<32x64xf32, #tpu.memory_space<vmem>>, %arg5: memref<32x64xf32, #tpu.memory_space<vmem>>) attributes {dimension_semantics = [#tpu.dimension_semantics<parallel>], iteration_bounds = array<i64: 1>, scalar_prefetch = 0 : i64, scratch_operands = 2 : i64, tpu.core_type = #tpu.core_type<tc>, window_params = [{transform_indices = @transform_0, window_bounds = array<i64: 8, 32, 256>}, {pipeline_mode = #tpu.pipeline_mode<synchronous>, transform_indices = @transform_1, window_bounds = array<i64: 64, 256>}, {transform_indices = @transform_2, window_bounds = array<i64: 8, 32, 64>}]} {
    %cst = arith.constant 0.000000e+00 : f32
    %0 = vector.broadcast %cst : f32 to vector<32x64xf32>
    %c0 = arith.constant 0 : index
    %c0_0 = arith.constant 0 : index
    %1 = vector.load %arg4[%c0, %c0_0] : memref<32x64xf32, #tpu.memory_space<vmem>>, vector<32x64xf32>
    tpu.vector_store %arg4[%c0, %c0_0], %0 {strides = array<i32>} : memref<32x64xf32, #tpu.memory_space<vmem>>, vector<32x64xf32>,
    %cst_1 = arith.constant 0.000000e+00 : f32
    %2 = vector.broadcast %cst_1 : f32 to vector<32x64xf32>
    %c0_2 = arith.constant 0 : index
    %c0_3 = arith.constant 0 : index
    %3 = vector.load %arg5[%c0_2, %c0_3] : memref<32x64xf32, #tpu.memory_space<vmem>>, vector<32x64xf32>
    tpu.vector_store %arg5[%c0_2, %c0_3], %2 {strides = array<i32>} : memref<32x64xf32, #tpu.memory_space<vmem>>, vector<32x64xf32>,
    %c0_i32 = arith.constant 0 : i32
    %c8_i32 = arith.constant 8 : i32
    %4 = arith.addi %c0_i32, %c8_i32 : i32
    %c1_i32 = arith.constant 1 : i32
    scf.for %arg6 = %c0_i32 to %4 step %c1_i32  : i32 {
      %c0_5 = arith.constant 0 : index
      %c0_6 = arith.constant 0 : index
      %5 = vector.load %arg4[%c0_5, %c0_6] : memref<32x64xf32, #tpu.memory_space<vmem>>, vector<32x64xf32>
      %6 = arith.index_cast %arg6 : i32 to index
      %c0_7 = arith.constant 0 : index
      %c0_8 = arith.constant 0 : index
      %7 = vector.load %arg1[%6, %c0_7, %c0_8] : memref<8x32x256xf32, #tpu.memory_space<vmem>>, vector<1x32x256xf32>
      %8 = vector.shape_cast %7 : vector<1x32x256xf32> to vector<32x256xf32>
      %9 = arith.truncf %5 : vector<32x64xf32> to vector<32x64xbf16>
      %c0_9 = arith.constant 0 : index
      %c0_10 = arith.constant 0 : index
      %10 = vector.load %arg2[%c0_9, %c0_10] : memref<64x256xbf16, #tpu.memory_space<vmem>>, vector<64x256xbf16>
      %cst_11 = arith.constant dense<0.000000e+00> : vector<32x256xf32>
      %11 = tpu.matmul %9, %10, %cst_11 {dimension_numbers = #tpu.dot_dimension_numbers<[1], [0], [0], [1], [0, 0, 1, 1], [], []>} : vector<32x64xbf16>, vector<64x256xbf16>, vector<32x256xf32> -> vector<32x256xf32>
      %12 = arith.addf %8, %11 : vector<32x256xf32>
      %13 = vector.extract_strided_slice %12 {offsets = [0, 0], sizes = [32, 64], strides = [1, 1]} : vector<32x256xf32> to vector<32x64xf32>
      %14 = arith.negf %13 : vector<32x64xf32>
      %15 = math.exp %14 : vector<32x64xf32>
      %cst_12 = arith.constant 1.000000e+00 : f32
      %16 = vector.broadcast %cst_12 : f32 to vector<32x64xf32>
      %17 = arith.addf %16, %15 : vector<32x64xf32>
      %18 = arith.divf %16, %17 : vector<32x64xf32>
      %19 = vector.extract_strided_slice %12 {offsets = [0, 64], sizes = [32, 64], strides = [1, 1]} : vector<32x256xf32> to vector<32x64xf32>
      %20 = arith.negf %19 : vector<32x64xf32>
      %21 = math.exp %20 : vector<32x64xf32>
      %cst_13 = arith.constant 1.000000e+00 : f32
      %22 = vector.broadcast %cst_13 : f32 to vector<32x64xf32>
      %23 = arith.addf %22, %21 : vector<32x64xf32>
      %24 = arith.divf %22, %23 : vector<32x64xf32>
      %25 = vector.extract_strided_slice %12 {offsets = [0, 128], sizes = [32, 64], strides = [1, 1]} : vector<32x256xf32> to vector<32x64xf32>
      %26 = math.tanh %25 : vector<32x64xf32>
      %27 = vector.extract_strided_slice %12 {offsets = [0, 192], sizes = [32, 64], strides = [1, 1]} : vector<32x256xf32> to vector<32x64xf32>
      %28 = arith.negf %27 : vector<32x64xf32>
      %29 = math.exp %28 : vector<32x64xf32>
      %cst_14 = arith.constant 1.000000e+00 : f32
      %30 = vector.broadcast %cst_14 : f32 to vector<32x64xf32>
      %31 = arith.addf %30, %29 : vector<32x64xf32>
      %32 = arith.divf %30, %31 : vector<32x64xf32>
      %c0_15 = arith.constant 0 : index
      %c0_16 = arith.constant 0 : index
      %33 = vector.load %arg5[%c0_15, %c0_16] : memref<32x64xf32, #tpu.memory_space<vmem>>, vector<32x64xf32>
      %34 = arith.mulf %24, %33 : vector<32x64xf32>
      %35 = arith.mulf %18, %26 : vector<32x64xf32>
      %36 = arith.addf %34, %35 : vector<32x64xf32>
      %c0_17 = arith.constant 0 : index
      %c0_18 = arith.constant 0 : index
      %37 = vector.load %arg5[%c0_17, %c0_18] : memref<32x64xf32, #tpu.memory_space<vmem>>, vector<32x64xf32>
      tpu.vector_store %arg5[%c0_17, %c0_18], %36 {strides = array<i32>} : memref<32x64xf32, #tpu.memory_space<vmem>>, vector<32x64xf32>,
      %38 = math.tanh %36 : vector<32x64xf32>
      %39 = arith.mulf %32, %38 : vector<32x64xf32>
      %c0_19 = arith.constant 0 : index
      %c0_20 = arith.constant 0 : index
      %40 = vector.load %arg4[%c0_19, %c0_20] : memref<32x64xf32, #tpu.memory_space<vmem>>, vector<32x64xf32>
      tpu.vector_store %arg4[%c0_19, %c0_20], %39 {strides = array<i32>} : memref<32x64xf32, #tpu.memory_space<vmem>>, vector<32x64xf32>,
      %c0_21 = arith.constant 0 : index
      %c0_22 = arith.constant 0 : index
      %41 = vector.load %arg4[%c0_21, %c0_22] : memref<32x64xf32, #tpu.memory_space<vmem>>, vector<32x64xf32>
      %42 = arith.index_cast %arg6 : i32 to index
      %c0_23 = arith.constant 0 : index
      %c0_24 = arith.constant 0 : index
      %43 = vector.load %arg3[%42, %c0_23, %c0_24] : memref<8x32x64xf32, #tpu.memory_space<vmem>>, vector<1x32x64xf32>
      %44 = vector.shape_cast %43 : vector<1x32x64xf32> to vector<32x64xf32>
      %45 = vector.shape_cast %41 : vector<32x64xf32> to vector<1x32x64xf32>
      tpu.vector_store %arg3[%42, %c0_23, %c0_24], %45 {strides = array<i32>} : memref<8x32x64xf32, #tpu.memory_space<vmem>>, vector<1x32x64xf32>,
    }
    %c8_i32_4 = arith.constant 8 : i32
    return
  }
  func.func @transform_0(%arg0: i32) -> (i32, i32, i32) {
    %c0_i32 = arith.constant 0 : i32
    %c0_i32_0 = arith.constant 0 : i32
    %c0_i32_1 = arith.constant 0 : i32
    return %c0_i32, %arg0, %c0_i32_0 : i32, i32, i32
  }
  func.func @transform_1(%arg0: i32) -> (i32, i32) {
    %c0_i32 = arith.constant 0 : i32
    %c0_i32_0 = arith.constant 0 : i32
    %c0_i32_1 = arith.constant 0 : i32
    return %c0_i32, %c0_i32_0 : i32, i32
  }
  func.func @transform_2(%arg0: i32) -> (i32, i32, i32) {
    %c0_i32 = arith.constant 0 : i32
    %c0_i32_0 = arith.constant 0 : i32
    %c0_i32_1 = arith.constant 0 : i32
    return %c0_i32, %arg0, %c0_i32_0 : i32, i32, i32
  }
}

module attributes {stable_mosaic.version = 11 : i64} {
  func.func @_instnorm_res_kernel(%arg0: i32, %arg1: memref<128x128xf32, #tpu.memory_space<vmem>>, %arg2: memref<128x128xf32, #tpu.memory_space<vmem>>, %arg3: memref<128x128xf32, #tpu.memory_space<vmem>>) attributes {dimension_semantics = [#tpu.dimension_semantics<parallel>], iteration_bounds = array<i64: 1>, scalar_prefetch = 0 : i64, scratch_operands = 0 : i64, tpu.core_type = #tpu.core_type<tc>, window_params = [{transform_indices = @transform_0, window_bounds = array<i64: 128, 128>}, {transform_indices = @transform_1, window_bounds = array<i64: 128, 128>}, {transform_indices = @transform_2, window_bounds = array<i64: 128, 128>}]} {
    %c0 = arith.constant 0 : index
    %c0_0 = arith.constant 0 : index
    %0 = vector.load %arg1[%c0, %c0_0] : memref<128x128xf32, #tpu.memory_space<vmem>>, vector<128x128xf32>
    %cst = arith.constant dense<0.000000e+00> : vector<128xf32>
    %1 = vector.multi_reduction <add>, %0, %cst [1] : vector<128x128xf32> to vector<128xf32>
    %2 = vector.shape_cast %1 : vector<128xf32> to vector<128x1xf32>
    %cst_1 = arith.constant 7.812500e-03 : f32
    %3 = vector.broadcast %cst_1 : f32 to vector<128x1xf32>
    %4 = arith.mulf %2, %3 : vector<128x1xf32>
    %5 = vector.broadcast %4 : vector<128x1xf32> to vector<128x128xf32>
    %6 = arith.subf %0, %5 : vector<128x128xf32>
    %7 = arith.mulf %6, %6 : vector<128x128xf32>
    %cst_2 = arith.constant dense<0.000000e+00> : vector<128xf32>
    %8 = vector.multi_reduction <add>, %7, %cst_2 [1] : vector<128x128xf32> to vector<128xf32>
    %9 = vector.shape_cast %8 : vector<128xf32> to vector<128x1xf32>
    %cst_3 = arith.constant 7.812500e-03 : f32
    %10 = vector.broadcast %cst_3 : f32 to vector<128x1xf32>
    %11 = arith.mulf %9, %10 : vector<128x1xf32>
    %cst_4 = arith.constant 9.99999993E-9 : f32
    %12 = vector.broadcast %cst_4 : f32 to vector<128x1xf32>
    %13 = arith.addf %11, %12 : vector<128x1xf32>
    %14 = math.rsqrt %13 : vector<128x1xf32>
    %15 = vector.broadcast %14 : vector<128x1xf32> to vector<128x128xf32>
    %16 = arith.mulf %6, %15 : vector<128x128xf32>
    %c0_5 = arith.constant 0 : index
    %c0_6 = arith.constant 0 : index
    %17 = vector.load %arg2[%c0_5, %c0_6] : memref<128x128xf32, #tpu.memory_space<vmem>>, vector<128x128xf32>
    %18 = arith.addf %16, %17 : vector<128x128xf32>
    %c0_7 = arith.constant 0 : index
    %c0_8 = arith.constant 0 : index
    %19 = vector.load %arg3[%c0_7, %c0_8] : memref<128x128xf32, #tpu.memory_space<vmem>>, vector<128x128xf32>
    tpu.vector_store %arg3[%c0_7, %c0_8], %18 {strides = array<i32>} : memref<128x128xf32, #tpu.memory_space<vmem>>, vector<128x128xf32>,
    return
  }
  func.func @transform_0(%arg0: i32) -> (i32, i32) {
    %c0_i32 = arith.constant 0 : i32
    %c0_i32_0 = arith.constant 0 : i32
    return %arg0, %c0_i32 : i32, i32
  }
  func.func @transform_1(%arg0: i32) -> (i32, i32) {
    %c0_i32 = arith.constant 0 : i32
    %c0_i32_0 = arith.constant 0 : i32
    return %arg0, %c0_i32 : i32, i32
  }
  func.func @transform_2(%arg0: i32) -> (i32, i32) {
    %c0_i32 = arith.constant 0 : i32
    %c0_i32_0 = arith.constant 0 : i32
    return %arg0, %c0_i32 : i32, i32
  }
}

</mosaic_0001>

<llo_original>
// kernel: dprnn_forward.8
$region0: #{dprnn_forward.8}
  #allocation0 [shape = 'u32[]', space=smem, size = 0x4, offset = 0x4, fixed_abs, tag = 'smem constant byte address 0x4 - core index']
  #allocation1 [shape = 'u32[72,128]{1,0:T(1,128)}', space=vmem, size = 0x9000, scoped, tag = 'internal scratch']
  %s0 = inlined_call_operand.vmem [shape: bf16[256,64], index: 0, kind: input, shape index: {}]
  %s1 = inlined_call_operand.vmem [shape: bf16[64,256], index: 1, kind: input, shape index: {}]
  %s2 = inlined_call_operand.vmem [shape: f32[1,256], index: 2, kind: input, shape index: {}]
  %s3 = inlined_call_operand.vmem [shape: f32[256,256], index: 3, kind: output, shape index: {}]
  %s4 = sld [smem:[#allocation0]]
  $region22: #{dprnn_forward.8} parent=0
    _
  %s6 = ssub.s32 1, %s4
  %s7 = scalar_select 0, %s6, %s4
  // Predicated region
  $region2: #{dprnn_forward.8} parent=0 // pred_check
    _
  $region3: #{dprnn_forward.8} parent=0 // pred_check_branch
    %9 = sbr.rel (0) target = $region5
  $region4: #{dprnn_forward.8} parent=0 // pred_region
    _
  $region5: #{dprnn_forward.8} parent=0 // pred_fallthru
    _
  // Predicated region
  $region6: #{dprnn_forward.8} parent=0 // pred_check
    _
  $region7: #{dprnn_forward.8} parent=0 // pred_check_branch
    %11 = sbr.rel (0) target = $region9
  $region8: #{dprnn_forward.8} parent=0 // pred_region
    _
  $region9: #{dprnn_forward.8} parent=0 // pred_fallthru
    _
  // Predicated region
  $region10: #{dprnn_forward.8} parent=0 // pred_check
    _
  $region11: #{dprnn_forward.8} parent=0 // pred_check_branch
    %13 = sbr.rel (0) target = $region13
  $region12: #{dprnn_forward.8} parent=0 // pred_region
    _
  $region13: #{dprnn_forward.8} parent=0 // pred_fallthru
    _
  %v15 = vld [vmem:[%s0] sm:$0xf]
  %v16 = vld [vmem:[%s0 + $0x4] sm:$0xf]
  %v17 = vld [vmem:[%s0 + $0x8] sm:$0xf]
  %v18 = vld [vmem:[%s0 + $0xc] sm:$0xf]
  %v19 = vld [vmem:[%s0 + $0x10] sm:$0xf]
  %v20 = vld [vmem:[%s0 + $0x14] sm:$0xf]
  %v21 = vld [vmem:[%s0 + $0x18] sm:$0xf]
  %v22 = vld [vmem:[%s0 + $0x1c] sm:$0xf]
  %v23 = vld [vmem:[%s0 + $0x20] sm:$0xf]
  %v24 = vld [vmem:[%s0 + $0x24] sm:$0xf]
  %v25 = vld [vmem:[%s0 + $0x28] sm:$0xf]
  %v26 = vld [vmem:[%s0 + $0x2c] sm:$0xf]
  %v27 = vld [vmem:[%s0 + $0x30] sm:$0xf]
  %v28 = vld [vmem:[%s0 + $0x34] sm:$0xf]
  %v29 = vld [vmem:[%s0 + $0x38] sm:$0xf]
  %v30 = vld [vmem:[%s0 + $0x3c] sm:$0xf]
  %v31 = vld [vmem:[%s0 + $0x40] sm:$0xf]
  %v32 = vld [vmem:[%s0 + $0x44] sm:$0xf]
  %v33 = vld [vmem:[%s0 + $0x48] sm:$0xf]
  %v34 = vld [vmem:[%s0 + $0x4c] sm:$0xf]
  %v35 = vld [vmem:[%s0 + $0x50] sm:$0xf]
  %v36 = vld [vmem:[%s0 + $0x54] sm:$0xf]
  %v37 = vld [vmem:[%s0 + $0x58] sm:$0xf]
  %v38 = vld [vmem:[%s0 + $0x5c] sm:$0xf]
  %v39 = vld [vmem:[%s0 + $0x60] sm:$0xf]
  %v40 = vld [vmem:[%s0 + $0x64] sm:$0xf]
  %v41 = vld [vmem:[%s0 + $0x68] sm:$0xf]
  %v42 = vld [vmem:[%s0 + $0x6c] sm:$0xf]
  %v43 = vld [vmem:[%s0 + $0x70] sm:$0xf]
  %v44 = vld [vmem:[%s0 + $0x74] sm:$0xf]
  %v45 = vld [vmem:[%s0 + $0x78] sm:$0xf]
  %v46 = vld [vmem:[%s0 + $0x7c] sm:$0xf]
  %v47 = vld [vmem:[%s1] sm:$0xff]
  %v48 = vld [vmem:[%s1 + $0x8] sm:$0xff]
  %v49 = vld [vmem:[%s1 + $0x10] sm:$0xff]
  %v50 = vld [vmem:[%s1 + $0x18] sm:$0xff]
  %v51 = vld [vmem:[%s1 + $0x20] sm:$0xff]
  %v52 = vld [vmem:[%s1 + $0x28] sm:$0xff]
  %v53 = vld [vmem:[%s1 + $0x30] sm:$0xff]
  %v54 = vld [vmem:[%s1 + $0x38] sm:$0xff]
  %v55 = vld [vmem:[%s2] sm:$0x3]
  %v57 = vperm.slane %v55, 0
  %v58 = vperm.slane %v55, 1
  %v93 = vunpack.c.l.b16 %v15
  %v94 = vunpack.c.l.b16 %v16
  %v95 = vunpack.c.l.b16 %v17
  %v96 = vunpack.c.l.b16 %v18
  %v97 = vunpack.c.l.b16 %v19
  %v98 = vunpack.c.l.b16 %v20
  %v99 = vunpack.c.l.b16 %v21
  %v100 = vunpack.c.l.b16 %v22
  %v101 = vunpack.c.l.b16 %v23
  %v102 = vunpack.c.l.b16 %v24
  %v103 = vunpack.c.l.b16 %v25
  %v104 = vunpack.c.l.b16 %v26
  %v105 = vunpack.c.l.b16 %v27
  %v106 = vunpack.c.l.b16 %v28
  %v107 = vunpack.c.l.b16 %v29
  %v108 = vunpack.c.l.b16 %v30
  %v109 = vunpack.c.l.b16 %v31
  %v110 = vunpack.c.l.b16 %v32
  %v111 = vunpack.c.l.b16 %v33
  %v112 = vunpack.c.l.b16 %v34
  %v113 = vunpack.c.l.b16 %v35
  %v114 = vunpack.c.l.b16 %v36
  %v115 = vunpack.c.l.b16 %v37
  %v116 = vunpack.c.l.b16 %v38
  %v117 = vunpack.c.l.b16 %v39
  %v118 = vunpack.c.l.b16 %v40
  %v119 = vunpack.c.l.b16 %v41
  %v120 = vunpack.c.l.b16 %v42
  %v121 = vunpack.c.l.b16 %v43
  %v122 = vunpack.c.l.b16 %v44
  %v123 = vunpack.c.l.b16 %v45
  %v124 = vunpack.c.l.b16 %v46
  %v125 = vpack.c.b16 %v94, %v93
  %v126 = vpack.c.b16 %v96, %v95
  %v127 = vpack.c.b16 %v98, %v97
  %v128 = vpack.c.b16 %v100, %v99
  %v129 = vpack.c.b16 %v102, %v101
  %v130 = vpack.c.b16 %v104, %v103
  %v131 = vpack.c.b16 %v106, %v105
  %v132 = vpack.c.b16 %v108, %v107
  %v133 = vpack.c.b16 %v110, %v109
  %v134 = vpack.c.b16 %v112, %v111
  %v135 = vpack.c.b16 %v114, %v113
  %v136 = vpack.c.b16 %v116, %v115
  %v137 = vpack.c.b16 %v118, %v117
  %v138 = vpack.c.b16 %v120, %v119
  %v139 = vpack.c.b16 %v122, %v121
  %v140 = vpack.c.b16 %v124, %v123
  %v149 = vunpack.c.l.b16 %v47
  %v150 = vunpack.c.h.b16 %v47
  %v151 = vunpack.c.l.b16 %v48
  %v152 = vunpack.c.h.b16 %v48
  %v153 = vunpack.c.l.b16 %v49
  %v154 = vunpack.c.h.b16 %v49
  %v155 = vunpack.c.l.b16 %v50
  %v156 = vunpack.c.h.b16 %v50
  %v157 = vunpack.c.l.b16 %v51
  %v158 = vunpack.c.h.b16 %v51
  %v159 = vunpack.c.l.b16 %v52
  %v160 = vunpack.c.h.b16 %v52
  %v161 = vunpack.c.l.b16 %v53
  %v162 = vunpack.c.h.b16 %v53
  %v163 = vunpack.c.l.b16 %v54
  %v164 = vunpack.c.h.b16 %v54
  %v165 = vpack.c.b16 %v151, %v149
  %v166 = vpack.c.b16 %v152, %v150
  %v167 = vpack.c.b16 %v155, %v153
  %v168 = vpack.c.b16 %v156, %v154
  %v169 = vpack.c.b16 %v159, %v157
  %v170 = vpack.c.b16 %v160, %v158
  %v171 = vpack.c.b16 %v163, %v161
  %v172 = vpack.c.b16 %v164, %v162
  %vm181 = vcmask 523264
  %v183 = vsel %vm181, %v125, 0
  %v186 = vsel %vm181, %v126, 0
  %v189 = vsel %vm181, %v127, 0
  %v192 = vsel %vm181, %v128, 0
  %v195 = vsel %vm181, %v129, 0
  %v198 = vsel %vm181, %v130, 0
  %v201 = vsel %vm181, %v131, 0
  %v204 = vsel %vm181, %v132, 0
  %v207 = vsel %vm181, %v133, 0
  %v210 = vsel %vm181, %v134, 0
  %v213 = vsel %vm181, %v135, 0
  %v216 = vsel %vm181, %v136, 0
  %v219 = vsel %vm181, %v137, 0
  %v222 = vsel %vm181, %v138, 0
  %v225 = vsel %vm181, %v139, 0
  %v228 = vsel %vm181, %v140, 0
  %230 = vmatpush.bf16.msra.mxu0 0
  %231 = vmatpush.bf16.msra.mxu0 0
  %232 = vmatpush.bf16.msra.mxu0 0
  %233 = vmatpush.bf16.msra.mxu0 0
  %234 = vmatpush.bf16.msra.mxu0 %v171
  %235 = vmatpush.bf16.msra.mxu0 %v169
  %236 = vmatpush.bf16.msra.mxu0 %v167
  %237 = vmatpush.bf16.msra.mxu0 %v165
  %238 = vmatmul.bf16.gmra.mxu0 %v183
  %v239 = vpop.f32.mrf.mxu0
  %v240 = vadd.f32 %v57, %v239
  %v241 = vpop.f32.mrf.mxu0
  %v242 = vadd.f32 %v57, %v241
  %243 = vmatmul.bf16.gmra.mxu0 %v186
  %v244 = vpop.f32.mrf.mxu0
  %v245 = vadd.f32 %v57, %v244
  %v246 = vpop.f32.mrf.mxu0
  %v247 = vadd.f32 %v57, %v246
  %248 = vmatmul.bf16.gmra.mxu0 %v189
  %v249 = vpop.f32.mrf.mxu0
  %v250 = vadd.f32 %v57, %v249
  %v251 = vpop.f32.mrf.mxu0
  %v252 = vadd.f32 %v57, %v251
  %253 = vmatmul.bf16.gmra.mxu0 %v192
  %v254 = vpop.f32.mrf.mxu0
  %v255 = vadd.f32 %v57, %v254
  %v256 = vpop.f32.mrf.mxu0
  %v257 = vadd.f32 %v57, %v256
  %258 = vmatmul.bf16.gmra.mxu0 %v195
  %v259 = vpop.f32.mrf.mxu0
  %v260 = vadd.f32 %v57, %v259
  %v261 = vpop.f32.mrf.mxu0
  %v262 = vadd.f32 %v57, %v261
  %263 = vmatmul.bf16.gmra.mxu0 %v198
  %v264 = vpop.f32.mrf.mxu0
  %v265 = vadd.f32 %v57, %v264
  %v266 = vpop.f32.mrf.mxu0
  %v267 = vadd.f32 %v57, %v266
  %268 = vmatmul.bf16.gmra.mxu0 %v201
  %v269 = vpop.f32.mrf.mxu0
  %v270 = vadd.f32 %v57, %v269
  %v271 = vpop.f32.mrf.mxu0
  %v272 = vadd.f32 %v57, %v271
  %273 = vmatmul.bf16.gmra.mxu0 %v204
  %v274 = vpop.f32.mrf.mxu0
  %v275 = vadd.f32 %v57, %v274
  %v276 = vpop.f32.mrf.mxu0
  %v277 = vadd.f32 %v57, %v276
  %278 = vmatmul.bf16.gmra.mxu0 %v207
  %v279 = vpop.f32.mrf.mxu0
  %v280 = vadd.f32 %v57, %v279
  %v281 = vpop.f32.mrf.mxu0
  %v282 = vadd.f32 %v57, %v281
  %283 = vmatmul.bf16.gmra.mxu0 %v210
  %v284 = vpop.f32.mrf.mxu0
  %v285 = vadd.f32 %v57, %v284
  %v286 = vpop.f32.mrf.mxu0
  %v287 = vadd.f32 %v57, %v286
  %288 = vmatmul.bf16.gmra.mxu0 %v213
  %v289 = vpop.f32.mrf.mxu0
  %v290 = vadd.f32 %v57, %v289
  %v291 = vpop.f32.mrf.mxu0
  %v292 = vadd.f32 %v57, %v291
  %293 = vmatmul.bf16.gmra.mxu0 %v216
  %v294 = vpop.f32.mrf.mxu0
  %v295 = vadd.f32 %v57, %v294
  %v296 = vpop.f32.mrf.mxu0
  %v297 = vadd.f32 %v57, %v296
  %298 = vmatmul.bf16.gmra.mxu0 %v219
  %v299 = vpop.f32.mrf.mxu0
  %v300 = vadd.f32 %v57, %v299
  %v301 = vpop.f32.mrf.mxu0
  %v302 = vadd.f32 %v57, %v301
  %303 = vmatmul.bf16.gmra.mxu0 %v222
  %v304 = vpop.f32.mrf.mxu0
  %v305 = vadd.f32 %v57, %v304
  %v306 = vpop.f32.mrf.mxu0
  %v307 = vadd.f32 %v57, %v306
  %308 = vmatmul.bf16.gmra.mxu0 %v225
  %v309 = vpop.f32.mrf.mxu0
  %v310 = vadd.f32 %v57, %v309
  %v311 = vpop.f32.mrf.mxu0
  %v312 = vadd.f32 %v57, %v311
  %313 = vmatmul.bf16.gmra.mxu0 %v228
  %v314 = vpop.f32.mrf.mxu0
  %v315 = vadd.f32 %v57, %v314
  %v316 = vpop.f32.mrf.mxu0
  %v317 = vadd.f32 %v57, %v316
  %318 = vdwg.mxu0
  %319 = vmatpush.bf16.msra.mxu0 0
  %320 = vmatpush.bf16.msra.mxu0 0
  %321 = vmatpush.bf16.msra.mxu0 0
  %322 = vmatpush.bf16.msra.mxu0 0
  %323 = vmatpush.bf16.msra.mxu0 %v172
  %324 = vmatpush.bf16.msra.mxu0 %v170
  %325 = vmatpush.bf16.msra.mxu0 %v168
  %326 = vmatpush.bf16.msra.mxu0 %v166
  %327 = vmatmul.bf16.gmra.mxu0 %v183
  %v328 = vpop.f32.mrf.mxu0
  %v329 = vadd.f32 %v58, %v328
  %v330 = vpop.f32.mrf.mxu0
  %v331 = vadd.f32 %v58, %v330
  %332 = vmatmul.bf16.gmra.mxu0 %v186
  %v333 = vpop.f32.mrf.mxu0
  %v334 = vadd.f32 %v58, %v333
  %v335 = vpop.f32.mrf.mxu0
  %v336 = vadd.f32 %v58, %v335
  %337 = vmatmul.bf16.gmra.mxu0 %v189
  %v338 = vpop.f32.mrf.mxu0
  %v339 = vadd.f32 %v58, %v338
  %v340 = vpop.f32.mrf.mxu0
  %v341 = vadd.f32 %v58, %v340
  %342 = vmatmul.bf16.gmra.mxu0 %v192
  %v343 = vpop.f32.mrf.mxu0
  %v344 = vadd.f32 %v58, %v343
  %v345 = vpop.f32.mrf.mxu0
  %v346 = vadd.f32 %v58, %v345
  %347 = vmatmul.bf16.gmra.mxu0 %v195
  %v348 = vpop.f32.mrf.mxu0
  %v349 = vadd.f32 %v58, %v348
  %v350 = vpop.f32.mrf.mxu0
  %v351 = vadd.f32 %v58, %v350
  %352 = vmatmul.bf16.gmra.mxu0 %v198
  %v353 = vpop.f32.mrf.mxu0
  %v354 = vadd.f32 %v58, %v353
  %v355 = vpop.f32.mrf.mxu0
  %v356 = vadd.f32 %v58, %v355
  %357 = vmatmul.bf16.gmra.mxu0 %v201
  %v358 = vpop.f32.mrf.mxu0
  %v359 = vadd.f32 %v58, %v358
  %v360 = vpop.f32.mrf.mxu0
  %v361 = vadd.f32 %v58, %v360
  %362 = vmatmul.bf16.gmra.mxu0 %v204
  %v363 = vpop.f32.mrf.mxu0
  %v364 = vadd.f32 %v58, %v363
  %v365 = vpop.f32.mrf.mxu0
  %v366 = vadd.f32 %v58, %v365
  %367 = vmatmul.bf16.gmra.mxu0 %v207
  %v368 = vpop.f32.mrf.mxu0
  %v369 = vadd.f32 %v58, %v368
  %v370 = vpop.f32.mrf.mxu0
  %v371 = vadd.f32 %v58, %v370
  %372 = vmatmul.bf16.gmra.mxu0 %v210
  %v373 = vpop.f32.mrf.mxu0
  %v374 = vadd.f32 %v58, %v373
  %v375 = vpop.f32.mrf.mxu0
  %v376 = vadd.f32 %v58, %v375
  %377 = vmatmul.bf16.gmra.mxu0 %v213
  %v378 = vpop.f32.mrf.mxu0
  %v379 = vadd.f32 %v58, %v378
  %v380 = vpop.f32.mrf.mxu0
  %v381 = vadd.f32 %v58, %v380
  %382 = vmatmul.bf16.gmra.mxu0 %v216
  %v383 = vpop.f32.mrf.mxu0
  %v384 = vadd.f32 %v58, %v383
  %v385 = vpop.f32.mrf.mxu0
  %v386 = vadd.f32 %v58, %v385
  %387 = vmatmul.bf16.gmra.mxu0 %v219
  %v388 = vpop.f32.mrf.mxu0
  %v389 = vadd.f32 %v58, %v388
  %v390 = vpop.f32.mrf.mxu0
  %v391 = vadd.f32 %v58, %v390
  %392 = vmatmul.bf16.gmra.mxu0 %v222
  %v393 = vpop.f32.mrf.mxu0
  %v394 = vadd.f32 %v58, %v393
  %v395 = vpop.f32.mrf.mxu0
  %v396 = vadd.f32 %v58, %v395
  %397 = vmatmul.bf16.gmra.mxu0 %v225
  %v398 = vpop.f32.mrf.mxu0
  %v399 = vadd.f32 %v58, %v398
  %v400 = vpop.f32.mrf.mxu0
  %v401 = vadd.f32 %v58, %v400
  %402 = vmatmul.bf16.gmra.mxu0 %v228
  %v403 = vpop.f32.mrf.mxu0
  %v404 = vadd.f32 %v58, %v403
  %v405 = vpop.f32.mrf.mxu0
  %v406 = vadd.f32 %v58, %v405
  %407 = vdwg.mxu0
  %408 = vst [vmem:[%s3] sm:$0xff] %v240
  %409 = vst [vmem:[%s3 + $0x8] sm:$0xff] %v329
  %410 = vst [vmem:[%s3 + $0x10] sm:$0xff] %v242
  %411 = vst [vmem:[%s3 + $0x18] sm:$0xff] %v331
  %412 = vst [vmem:[%s3 + $0x20] sm:$0xff] %v245
  %413 = vst [vmem:[%s3 + $0x28] sm:$0xff] %v334
  %414 = vst [vmem:[%s3 + $0x30] sm:$0xff] %v247
  %415 = vst [vmem:[%s3 + $0x38] sm:$0xff] %v336
  %416 = vst [vmem:[%s3 + $0x40] sm:$0xff] %v250
  %417 = vst [vmem:[%s3 + $0x48] sm:$0xff] %v339
  %418 = vst [vmem:[%s3 + $0x50] sm:$0xff] %v252
  %419 = vst [vmem:[%s3 + $0x58] sm:$0xff] %v341
  %420 = vst [vmem:[%s3 + $0x60] sm:$0xff] %v255
  %421 = vst [vmem:[%s3 + $0x68] sm:$0xff] %v344
  %422 = vst [vmem:[%s3 + $0x70] sm:$0xff] %v257
  %423 = vst [vmem:[%s3 + $0x78] sm:$0xff] %v346
  %424 = vst [vmem:[%s3 + $0x80] sm:$0xff] %v260
  %425 = vst [vmem:[%s3 + $0x88] sm:$0xff] %v349
  %426 = vst [vmem:[%s3 + $0x90] sm:$0xff] %v262
  %427 = vst [vmem:[%s3 + $0x98] sm:$0xff] %v351
  %428 = vst [vmem:[%s3 + $0xa0] sm:$0xff] %v265
  %429 = vst [vmem:[%s3 + $0xa8] sm:$0xff] %v354
  %430 = vst [vmem:[%s3 + $0xb0] sm:$0xff] %v267
  %431 = vst [vmem:[%s3 + $0xb8] sm:$0xff] %v356
  %432 = vst [vmem:[%s3 + $0xc0] sm:$0xff] %v270
  %433 = vst [vmem:[%s3 + $0xc8] sm:$0xff] %v359
  %434 = vst [vmem:[%s3 + $0xd0] sm:$0xff] %v272
  %435 = vst [vmem:[%s3 + $0xd8] sm:$0xff] %v361
  %436 = vst [vmem:[%s3 + $0xe0] sm:$0xff] %v275
  %437 = vst [vmem:[%s3 + $0xe8] sm:$0xff] %v364
  %438 = vst [vmem:[%s3 + $0xf0] sm:$0xff] %v277
  %439 = vst [vmem:[%s3 + $0xf8] sm:$0xff] %v366
  %440 = vst [vmem:[%s3 + $0x100] sm:$0xff] %v280
  %441 = vst [vmem:[%s3 + $0x108] sm:$0xff] %v369
  %442 = vst [vmem:[%s3 + $0x110] sm:$0xff] %v282
  %443 = vst [vmem:[%s3 + $0x118] sm:$0xff] %v371
  %444 = vst [vmem:[%s3 + $0x120] sm:$0xff] %v285
  %445 = vst [vmem:[%s3 + $0x128] sm:$0xff] %v374
  %446 = vst [vmem:[%s3 + $0x130] sm:$0xff] %v287
  %447 = vst [vmem:[%s3 + $0x138] sm:$0xff] %v376
  %448 = vst [vmem:[%s3 + $0x140] sm:$0xff] %v290
  %449 = vst [vmem:[%s3 + $0x148] sm:$0xff] %v379
  %450 = vst [vmem:[%s3 + $0x150] sm:$0xff] %v292
  %451 = vst [vmem:[%s3 + $0x158] sm:$0xff] %v381
  %452 = vst [vmem:[%s3 + $0x160] sm:$0xff] %v295
  %453 = vst [vmem:[%s3 + $0x168] sm:$0xff] %v384
  %454 = vst [vmem:[%s3 + $0x170] sm:$0xff] %v297
  %455 = vst [vmem:[%s3 + $0x178] sm:$0xff] %v386
  %456 = vst [vmem:[%s3 + $0x180] sm:$0xff] %v300
  %457 = vst [vmem:[%s3 + $0x188] sm:$0xff] %v389
  %458 = vst [vmem:[%s3 + $0x190] sm:$0xff] %v302
  %459 = vst [vmem:[%s3 + $0x198] sm:$0xff] %v391
  %460 = vst [vmem:[%s3 + $0x1a0] sm:$0xff] %v305
  %461 = vst [vmem:[%s3 + $0x1a8] sm:$0xff] %v394
  %462 = vst [vmem:[%s3 + $0x1b0] sm:$0xff] %v307
  %463 = vst [vmem:[%s3 + $0x1b8] sm:$0xff] %v396
  %464 = vst [vmem:[%s3 + $0x1c0] sm:$0xff] %v310
  %465 = vst [vmem:[%s3 + $0x1c8] sm:$0xff] %v399
  %466 = vst [vmem:[%s3 + $0x1d0] sm:$0xff] %v312
  %467 = vst [vmem:[%s3 + $0x1d8] sm:$0xff] %v401
  %468 = vst [vmem:[%s3 + $0x1e0] sm:$0xff] %v315
  %469 = vst [vmem:[%s3 + $0x1e8] sm:$0xff] %v404
  %470 = vst [vmem:[%s3 + $0x1f0] sm:$0xff] %v317
  %471 = vst [vmem:[%s3 + $0x1f8] sm:$0xff] %v406
  // Predicated region
  $region14: #{dprnn_forward.8} parent=0 // pred_check
    _
  $region15: #{dprnn_forward.8} parent=0 // pred_check_branch
    %473 = sbr.rel (0) target = $region17
  $region16: #{dprnn_forward.8} parent=0 // pred_region
    _
  $region17: #{dprnn_forward.8} parent=0 // pred_fallthru
    _
  // Predicated region
  $region18: #{dprnn_forward.8} parent=0 // pred_check
    _
  $region19: #{dprnn_forward.8} parent=0 // pred_check_branch
    %475 = sbr.rel (0) target = $region21
  $region20: #{dprnn_forward.8} parent=0 // pred_region
    _
  $region21: #{dprnn_forward.8} parent=0 // pred_fallthru
    _

// kernel: dprnn_forward.9
$region0: #{dprnn_forward.9}
  #allocation0 [shape = 'u32[]', space=smem, size = 0x4, offset = 0x4, fixed_abs, tag = 'smem constant byte address 0x4 - core index']
  #allocation1 [shape = 'u32[72,128]{1,0:T(1,128)}', space=vmem, size = 0x9000, scoped, tag = 'internal scratch']
  #allocation2 [shape = 'f32[16,64]{1,0:T(8,128)}', space=vmem, size = 0x2000, scoped, tag = 'scratch operand']
  #allocation3 [shape = 'f32[16,64]{1,0:T(8,128)}', space=vmem, size = 0x2000, scoped, tag = 'scratch operand']
  %s0 = inlined_call_operand.vmem [shape: f32[16,16,256], index: 0, kind: input, shape index: {}]
  %s1 = inlined_call_operand.vmem [shape: bf16[64,256], index: 1, kind: input, shape index: {}]
  %s2 = inlined_call_operand.vmem [shape: f32[16,16,64], index: 2, kind: output, shape index: {}]
  %s3 = sld [smem:[#allocation0]]
  $region25: #{dprnn_forward.9} parent=0
    _
  %s5 = ssub.s32 1, %s3
  %s6 = scalar_select 0, %s5, %s3
  // Predicated region
  $region2: #{dprnn_forward.9} parent=0 // pred_check
    _
  $region3: #{dprnn_forward.9} parent=0 // pred_check_branch
    %8 = sbr.rel (0) target = $region5
  $region4: #{dprnn_forward.9} parent=0 // pred_region
    _
  $region5: #{dprnn_forward.9} parent=0 // pred_fallthru
    _
  // Predicated region
  $region6: #{dprnn_forward.9} parent=0 // pred_check
    _
  $region7: #{dprnn_forward.9} parent=0 // pred_check_branch
    %10 = sbr.rel (0) target = $region9
  $region8: #{dprnn_forward.9} parent=0 // pred_region
    _
  $region9: #{dprnn_forward.9} parent=0 // pred_fallthru
    _
  %vm12 = vcmask 523264
  %13 = vst.msk [vmem:[#allocation2] sm:$0xff] %vm12, 0.0
  %14 = vst.msk [vmem:[#allocation2 + $0x8] sm:$0xff] %vm12, 0.0
  %15 = vst.msk [vmem:[#allocation3] sm:$0xff] %vm12, 0.0
  %16 = vst.msk [vmem:[#allocation3 + $0x8] sm:$0xff] %vm12, 0.0
  loop: start=0, step=1, limit=16
  $region10: #{dprnn_forward.9} parent=0 // loop_pre_header
    _
  $region11: #{dprnn_forward.9} parent=0 // loop_header
    %s18 = sphi 0, %s22
    %p19 = scmp.ge.s32.totalorder %s18, 16
  $region12: #{dprnn_forward.9} parent=0 // loop_header_branch
    %21 = sbr.rel (%p19) target = $region16
  $region13: #{dprnn_forward.9} parent=0 // loop_body
    %v23 = vld [vmem:[#allocation2] sm:$0xff]
    %v24 = vld [vmem:[#allocation2 + $0x8] sm:$0xff]
    %s25 = smul.u32 %s18, 4
    %s26 = smul.addr %s25, 8
    %s27 = scalar_lea.vmem %s0, %s26
    %v28 = vld [vmem:[%s27] sm:$0xff]
    %v29 = vld [vmem:[%s27 + $0x8] sm:$0xff]
    %v30 = vld [vmem:[%s27 + $0x10] sm:$0xff]
    %v31 = vld [vmem:[%s27 + $0x18] sm:$0xff]
    %v32 = vpack.c.bf16 %v24, %v23
    %v33 = vld [vmem:[%s1] sm:$0xff]
    %v34 = vld [vmem:[%s1 + $0x8] sm:$0xff]
    %v35 = vld [vmem:[%s1 + $0x10] sm:$0xff]
    %v36 = vld [vmem:[%s1 + $0x18] sm:$0xff]
    %v37 = vld [vmem:[%s1 + $0x20] sm:$0xff]
    %v38 = vld [vmem:[%s1 + $0x28] sm:$0xff]
    %v39 = vld [vmem:[%s1 + $0x30] sm:$0xff]
    %v40 = vld [vmem:[%s1 + $0x38] sm:$0xff]
    %v49 = vunpack.c.l.b16 %v33
    %v50 = vunpack.c.h.b16 %v33
    %v51 = vunpack.c.l.b16 %v34
    %v52 = vunpack.c.h.b16 %v34
    %v53 = vunpack.c.l.b16 %v35
    %v54 = vunpack.c.h.b16 %v35
    %v55 = vunpack.c.l.b16 %v36
    %v56 = vunpack.c.h.b16 %v36
    %v57 = vunpack.c.l.b16 %v37
    %v58 = vunpack.c.h.b16 %v37
    %v59 = vunpack.c.l.b16 %v38
    %v60 = vunpack.c.h.b16 %v38
    %v61 = vunpack.c.l.b16 %v39
    %v62 = vunpack.c.h.b16 %v39
    %v63 = vunpack.c.l.b16 %v40
    %v64 = vunpack.c.h.b16 %v40
    %v65 = vpack.c.b16 %v51, %v49
    %v66 = vpack.c.b16 %v52, %v50
    %v67 = vpack.c.b16 %v55, %v53
    %v68 = vpack.c.b16 %v56, %v54
    %v69 = vpack.c.b16 %v59, %v57
    %v70 = vpack.c.b16 %v60, %v58
    %v71 = vpack.c.b16 %v63, %v61
    %v72 = vpack.c.b16 %v64, %v62
    %v82 = vsel %vm12, %v32, 0
    %84 = vmatpush.bf16.msra.mxu0 0
    %85 = vmatpush.bf16.msra.mxu0 0
    %86 = vmatpush.bf16.msra.mxu0 0
    %87 = vmatpush.bf16.msra.mxu0 0
    %88 = vmatpush.bf16.msra.mxu0 %v71
    %89 = vmatpush.bf16.msra.mxu0 %v69
    %90 = vmatpush.bf16.msra.mxu0 %v67
    %91 = vmatpush.bf16.msra.mxu0 %v65
    %92 = vmatmul.bf16.gmra.mxu0 %v82
    %v93 = vpop.f32.mrf.mxu0
    %v94 = vadd.f32 0.0, %v93
    %v95 = vpop.f32.mrf.mxu0
    %v96 = vadd.f32 0.0, %v95
    %97 = vdwg.mxu0
    %98 = vmatpush.bf16.msra.mxu0 0
    %99 = vmatpush.bf16.msra.mxu0 0
    %100 = vmatpush.bf16.msra.mxu0 0
    %101 = vmatpush.bf16.msra.mxu0 0
    %102 = vmatpush.bf16.msra.mxu0 %v72
    %103 = vmatpush.bf16.msra.mxu0 %v70
    %104 = vmatpush.bf16.msra.mxu0 %v68
    %105 = vmatpush.bf16.msra.mxu0 %v66
    %106 = vmatmul.bf16.gmra.mxu0 %v82
    %v107 = vpop.f32.mrf.mxu0
    %v108 = vadd.f32 0.0, %v107
    %v109 = vpop.f32.mrf.mxu0
    %v110 = vadd.f32 0.0, %v109
    %111 = vdwg.mxu0
    %v112 = vadd.f32 %v28, %v94
    %v113 = vadd.f32 %v29, %v108
    %v114 = vadd.f32 %v30, %v96
    %v115 = vadd.f32 %v31, %v110
    %v116 = vxor.u32 %v112, 2147483648
    %v117 = vxor.u32 %v114, 2147483648
    %v118 = vmul.f32 %v116, 1.442695
    %v119 = vpow.pop %v118
    %v120 = vmul.f32 %v117, 1.442695
    %v121 = vpow.pop %v120
    %v122 = vadd.f32 %v119, 1.0
    %v123 = vadd.f32 %v121, 1.0
    %v124 = vrcp.pop %v122
    %v125 = vmul.f32 %v122, %v124
    %v126 = vsub.f32 1.0, %v125
    %v127 = vmul.f32 %v124, %v126
    %v128 = vadd.f32 %v124, %v127
    %vm129 = vweird.f32 %v122
    %vm130 = vweird.f32 %v124
    %vm131 = vmor %vm129, %vm130
    %v132 = vsel %vm131, %v124, %v128
    %v133 = vand.u32 2147483647, %v122
    %vm134 = vcmp.eq.f32.partialorder %v133, 8.507059e+37
    %v135 = vand.u32 %v122, 2147483648
    %v136 = vor.u32 1.1754944e-38, %v135
    %v137 = vsel %vm134, %v136, %v132
    %v138 = vmul.f32 1.0, %v137
    %v139 = vrcp.pop %v123
    %v140 = vmul.f32 %v123, %v139
    %v141 = vsub.f32 1.0, %v140
    %v142 = vmul.f32 %v139, %v141
    %v143 = vadd.f32 %v139, %v142
    %vm144 = vweird.f32 %v123
    %vm145 = vweird.f32 %v139
    %vm146 = vmor %vm144, %vm145
    %v147 = vsel %vm146, %v139, %v143
    %v148 = vand.u32 2147483647, %v123
    %vm149 = vcmp.eq.f32.partialorder %v148, 8.507059e+37
    %v150 = vand.u32 %v123, 2147483648
    %v151 = vor.u32 1.1754944e-38, %v150
    %v152 = vsel %vm149, %v151, %v147
    %v153 = vmul.f32 1.0, %v152
    %v154 = vtanh.pop %v112
    %v155 = vtanh.pop %v114
    %v156 = vld [vmem:[#allocation3] sm:$0xff]
    %v157 = vld [vmem:[#allocation3 + $0x8] sm:$0xff]
    %160 = vrot.lane.b32.xlu0 %v156, 32
    %v161 = vpop.permute.xlu0 %160
    %162 = vrot.lane.b32.xlu0 %v157, 32
    %v163 = vpop.permute.xlu0 %162
    %v166 = vmul.f32 %v138, %v161
    %v167 = vmul.f32 %v153, %v163
    %170 = vrot.lane.b32.xlu0 %v154, 64
    %v171 = vpop.permute.xlu0 %170
    %172 = vrot.lane.b32.xlu0 %v155, 64
    %v173 = vpop.permute.xlu0 %172
    %v176 = vmul.f32 %v138, %v171
    %v177 = vmul.f32 %v153, %v173
    %180 = vrot.lane.b32.xlu0 %v176, 32
    %v181 = vpop.permute.xlu0 %180
    %182 = vrot.lane.b32.xlu0 %v177, 32
    %v183 = vpop.permute.xlu0 %182
    %v186 = vadd.f32 %v166, %v181
    %v187 = vadd.f32 %v167, %v183
    %190 = vrot.lane.b32.xlu0 %v186, 96
    %v191 = vpop.permute.xlu0 %190
    %192 = vrot.lane.b32.xlu0 %v187, 96
    %v193 = vpop.permute.xlu0 %192
    %vm196 = vcmask 261120
    %197 = vst.msk [vmem:[#allocation3] sm:$0xff] %vm196, %v191
    %198 = vst.msk [vmem:[#allocation3 + $0x8] sm:$0xff] %vm196, %v193
    %v199 = vtanh.pop %v186
    %v200 = vtanh.pop %v187
    %203 = vrot.lane.b32.xlu0 %v199, 64
    %v204 = vpop.permute.xlu0 %203
    %205 = vrot.lane.b32.xlu0 %v200, 64
    %v206 = vpop.permute.xlu0 %205
    %v209 = vmul.f32 %v138, %v204
    %v210 = vmul.f32 %v153, %v206
    %213 = vrot.lane.b32.xlu0 %v209, 32
    %v214 = vpop.permute.xlu0 %213
    %215 = vrot.lane.b32.xlu0 %v210, 32
    %v216 = vpop.permute.xlu0 %215
    %219 = vst.msk [vmem:[#allocation2] sm:$0xff] %vm196, %v214
    %220 = vst.msk [vmem:[#allocation2 + $0x8] sm:$0xff] %vm196, %v216
    %v221 = vxor.u32 %v113, 2147483648
    %v222 = vxor.u32 %v115, 2147483648
    %v223 = vmul.f32 %v221, 1.442695
    %v224 = vpow.pop %v223
    %v225 = vmul.f32 %v222, 1.442695
    %v226 = vpow.pop %v225
    %v227 = vadd.f32 %v224, 1.0
    %v228 = vadd.f32 %v226, 1.0
    %v229 = vrcp.pop %v227
    %v230 = vmul.f32 %v227, %v229
    %v231 = vsub.f32 1.0, %v230
    %v232 = vmul.f32 %v229, %v231
    %v233 = vadd.f32 %v229, %v232
    %vm234 = vweird.f32 %v227
    %vm235 = vweird.f32 %v229
    %vm236 = vmor %vm234, %vm235
    %v237 = vsel %vm236, %v229, %v233
    %v238 = vand.u32 2147483647, %v227
    %vm239 = vcmp.eq.f32.partialorder %v238, 8.507059e+37
    %v240 = vand.u32 %v227, 2147483648
    %v241 = vor.u32 1.1754944e-38, %v240
    %v242 = vsel %vm239, %v241, %v237
    %v243 = vmul.f32 1.0, %v242
    %v244 = vrcp.pop %v228
    %v245 = vmul.f32 %v228, %v244
    %v246 = vsub.f32 1.0, %v245
    %v247 = vmul.f32 %v244, %v246
    %v248 = vadd.f32 %v244, %v247
    %vm249 = vweird.f32 %v228
    %vm250 = vweird.f32 %v244
    %vm251 = vmor %vm249, %vm250
    %v252 = vsel %vm251, %v244, %v248
    %v253 = vand.u32 2147483647, %v228
    %vm254 = vcmp.eq.f32.partialorder %v253, 8.507059e+37
    %v255 = vand.u32 %v228, 2147483648
    %v256 = vor.u32 1.1754944e-38, %v255
    %v257 = vsel %vm254, %v256, %v252
    %v258 = vmul.f32 1.0, %v257
    %v259 = vtanh.pop %v113
    %v260 = vtanh.pop %v115
    %v261 = vld [vmem:[#allocation3] sm:$0xff]
    %v262 = vld [vmem:[#allocation3 + $0x8] sm:$0xff]
    %v263 = vmul.f32 %v243, %v261
    %v264 = vmul.f32 %v258, %v262
    %267 = vrot.lane.b32.xlu0 %v259, 64
    %v268 = vpop.permute.xlu0 %267
    %269 = vrot.lane.b32.xlu0 %v260, 64
    %v270 = vpop.permute.xlu0 %269
    %v273 = vmul.f32 %v243, %v268
    %v274 = vmul.f32 %v258, %v270
    %277 = vrot.lane.b32.xlu0 %v273, 32
    %v278 = vpop.permute.xlu0 %277
    %279 = vrot.lane.b32.xlu0 %v274, 32
    %v280 = vpop.permute.xlu0 %279
    %v283 = vadd.f32 %v263, %v278
    %v284 = vadd.f32 %v264, %v280
    %vm285 = vcmask 523520
    %286 = vst.msk [vmem:[#allocation3] sm:$0xff] %vm285, %v283
    %287 = vst.msk [vmem:[#allocation3 + $0x8] sm:$0xff] %vm285, %v284
    %v288 = vtanh.pop %v283
    %v289 = vtanh.pop %v284
    %292 = vrot.lane.b32.xlu0 %v288, 64
    %v293 = vpop.permute.xlu0 %292
    %294 = vrot.lane.b32.xlu0 %v289, 64
    %v295 = vpop.permute.xlu0 %294
    %v298 = vmul.f32 %v243, %v293
    %v299 = vmul.f32 %v258, %v295
    %302 = vrot.lane.b32.xlu0 %v298, 64
    %v303 = vpop.permute.xlu0 %302
    %304 = vrot.lane.b32.xlu0 %v299, 64
    %v305 = vpop.permute.xlu0 %304
    %308 = vst.msk [vmem:[#allocation2] sm:$0xff] %vm285, %v303
    %309 = vst.msk [vmem:[#allocation2 + $0x8] sm:$0xff] %vm285, %v305
    %v310 = vld [vmem:[#allocation2] sm:$0xff]
    %v311 = vld [vmem:[#allocation2 + $0x8] sm:$0xff]
    %s312 = smul.u32 %s18, 16
    %s313 = scalar_lea.vmem %s2, %s312
    %314 = vst.msk [vmem:[%s313] sm:$0xff] %vm12, %v310
    %315 = vst.msk [vmem:[%s313 + $0x8] sm:$0xff] %vm12, %v311
  $region14: #{dprnn_forward.9} parent=0 // loop_footer
    %s22 = sadd.s32 1, %s18
  $region15: #{dprnn_forward.9} parent=0 // loop_footer_branch
    %17 = sbr.rel target = $region11
  $region16: #{dprnn_forward.9} parent=0 // loop_exit
    _
  // Predicated region
  $region17: #{dprnn_forward.9} parent=0 // pred_check
    _
  $region18: #{dprnn_forward.9} parent=0 // pred_check_branch
    %317 = sbr.rel (0) target = $region20
  $region19: #{dprnn_forward.9} parent=0 // pred_region
    _
  $region20: #{dprnn_forward.9} parent=0 // pred_fallthru
    _
  // Predicated region
  $region21: #{dprnn_forward.9} parent=0 // pred_check
    _
  $region22: #{dprnn_forward.9} parent=0 // pred_check_branch
    %319 = sbr.rel (0) target = $region24
  $region23: #{dprnn_forward.9} parent=0 // pred_region
    _
  $region24: #{dprnn_forward.9} parent=0 // pred_fallthru
    _

// kernel: dprnn_forward.10
$region0: #{dprnn_forward.10}
  #allocation0 [shape = 'u32[]', space=smem, size = 0x4, offset = 0x4, fixed_abs, tag = 'smem constant byte address 0x4 - core index']
  #allocation1 [shape = 'u32[72,128]{1,0:T(1,128)}', space=vmem, size = 0x9000, scoped, tag = 'internal scratch']
  %s0 = inlined_call_operand.vmem [shape: bf16[256,64], index: 0, kind: input, shape index: {}]
  %s1 = inlined_call_operand.vmem [shape: bf16[64,64], index: 1, kind: input, shape index: {}]
  %s2 = inlined_call_operand.vmem [shape: f32[1,64], index: 2, kind: input, shape index: {}]
  %s3 = inlined_call_operand.vmem [shape: f32[256,64], index: 3, kind: output, shape index: {}]
  %s4 = sld [smem:[#allocation0]]
  $region22: #{dprnn_forward.10} parent=0
    _
  %s6 = ssub.s32 1, %s4
  %s7 = scalar_select 0, %s6, %s4
  // Predicated region
  $region2: #{dprnn_forward.10} parent=0 // pred_check
    _
  $region3: #{dprnn_forward.10} parent=0 // pred_check_branch
    %9 = sbr.rel (0) target = $region5
  $region4: #{dprnn_forward.10} parent=0 // pred_region
    _
  $region5: #{dprnn_forward.10} parent=0 // pred_fallthru
    _
  // Predicated region
  $region6: #{dprnn_forward.10} parent=0 // pred_check
    _
  $region7: #{dprnn_forward.10} parent=0 // pred_check_branch
    %11 = sbr.rel (0) target = $region9
  $region8: #{dprnn_forward.10} parent=0 // pred_region
    _
  $region9: #{dprnn_forward.10} parent=0 // pred_fallthru
    _
  // Predicated region
  $region10: #{dprnn_forward.10} parent=0 // pred_check
    _
  $region11: #{dprnn_forward.10} parent=0 // pred_check_branch
    %13 = sbr.rel (0) target = $region13
  $region12: #{dprnn_forward.10} parent=0 // pred_region
    _
  $region13: #{dprnn_forward.10} parent=0 // pred_fallthru
    _
  %v15 = vld [vmem:[%s0] sm:$0xf]
  %v16 = vld [vmem:[%s0 + $0x4] sm:$0xf]
  %v17 = vld [vmem:[%s0 + $0x8] sm:$0xf]
  %v18 = vld [vmem:[%s0 + $0xc] sm:$0xf]
  %v19 = vld [vmem:[%s0 + $0x10] sm:$0xf]
  %v20 = vld [vmem:[%s0 + $0x14] sm:$0xf]
  %v21 = vld [vmem:[%s0 + $0x18] sm:$0xf]
  %v22 = vld [vmem:[%s0 + $0x1c] sm:$0xf]
  %v23 = vld [vmem:[%s0 + $0x20] sm:$0xf]
  %v24 = vld [vmem:[%s0 + $0x24] sm:$0xf]
  %v25 = vld [vmem:[%s0 + $0x28] sm:$0xf]
  %v26 = vld [vmem:[%s0 + $0x2c] sm:$0xf]
  %v27 = vld [vmem:[%s0 + $0x30] sm:$0xf]
  %v28 = vld [vmem:[%s0 + $0x34] sm:$0xf]
  %v29 = vld [vmem:[%s0 + $0x38] sm:$0xf]
  %v30 = vld [vmem:[%s0 + $0x3c] sm:$0xf]
  %v31 = vld [vmem:[%s0 + $0x40] sm:$0xf]
  %v32 = vld [vmem:[%s0 + $0x44] sm:$0xf]
  %v33 = vld [vmem:[%s0 + $0x48] sm:$0xf]
  %v34 = vld [vmem:[%s0 + $0x4c] sm:$0xf]
  %v35 = vld [vmem:[%s0 + $0x50] sm:$0xf]
  %v36 = vld [vmem:[%s0 + $0x54] sm:$0xf]
  %v37 = vld [vmem:[%s0 + $0x58] sm:$0xf]
  %v38 = vld [vmem:[%s0 + $0x5c] sm:$0xf]
  %v39 = vld [vmem:[%s0 + $0x60] sm:$0xf]
  %v40 = vld [vmem:[%s0 + $0x64] sm:$0xf]
  %v41 = vld [vmem:[%s0 + $0x68] sm:$0xf]
  %v42 = vld [vmem:[%s0 + $0x6c] sm:$0xf]
  %v43 = vld [vmem:[%s0 + $0x70] sm:$0xf]
  %v44 = vld [vmem:[%s0 + $0x74] sm:$0xf]
  %v45 = vld [vmem:[%s0 + $0x78] sm:$0xf]
  %v46 = vld [vmem:[%s0 + $0x7c] sm:$0xf]
  %v47 = vld [vmem:[%s1] sm:$0xf]
  %v48 = vld [vmem:[%s1 + $0x4] sm:$0xf]
  %v49 = vld [vmem:[%s1 + $0x8] sm:$0xf]
  %v50 = vld [vmem:[%s1 + $0xc] sm:$0xf]
  %v51 = vld [vmem:[%s1 + $0x10] sm:$0xf]
  %v52 = vld [vmem:[%s1 + $0x14] sm:$0xf]
  %v53 = vld [vmem:[%s1 + $0x18] sm:$0xf]
  %v54 = vld [vmem:[%s1 + $0x1c] sm:$0xf]
  %v55 = vld [vmem:[%s2] sm:$0x1]
  %v57 = vperm.slane %v55, 0
  %v91 = vunpack.c.l.b16 %v15
  %v92 = vunpack.c.l.b16 %v16
  %v93 = vunpack.c.l.b16 %v17
  %v94 = vunpack.c.l.b16 %v18
  %v95 = vunpack.c.l.b16 %v19
  %v96 = vunpack.c.l.b16 %v20
  %v97 = vunpack.c.l.b16 %v21
  %v98 = vunpack.c.l.b16 %v22
  %v99 = vunpack.c.l.b16 %v23
  %v100 = vunpack.c.l.b16 %v24
  %v101 = vunpack.c.l.b16 %v25
  %v102 = vunpack.c.l.b16 %v26
  %v103 = vunpack.c.l.b16 %v27
  %v104 = vunpack.c.l.b16 %v28
  %v105 = vunpack.c.l.b16 %v29
  %v106 = vunpack.c.l.b16 %v30
  %v107 = vunpack.c.l.b16 %v31
  %v108 = vunpack.c.l.b16 %v32
  %v109 = vunpack.c.l.b16 %v33
  %v110 = vunpack.c.l.b16 %v34
  %v111 = vunpack.c.l.b16 %v35
  %v112 = vunpack.c.l.b16 %v36
  %v113 = vunpack.c.l.b16 %v37
  %v114 = vunpack.c.l.b16 %v38
  %v115 = vunpack.c.l.b16 %v39
  %v116 = vunpack.c.l.b16 %v40
  %v117 = vunpack.c.l.b16 %v41
  %v118 = vunpack.c.l.b16 %v42
  %v119 = vunpack.c.l.b16 %v43
  %v120 = vunpack.c.l.b16 %v44
  %v121 = vunpack.c.l.b16 %v45
  %v122 = vunpack.c.l.b16 %v46
  %v123 = vpack.c.b16 %v92, %v91
  %v124 = vpack.c.b16 %v94, %v93
  %v125 = vpack.c.b16 %v96, %v95
  %v126 = vpack.c.b16 %v98, %v97
  %v127 = vpack.c.b16 %v100, %v99
  %v128 = vpack.c.b16 %v102, %v101
  %v129 = vpack.c.b16 %v104, %v103
  %v130 = vpack.c.b16 %v106, %v105
  %v131 = vpack.c.b16 %v108, %v107
  %v132 = vpack.c.b16 %v110, %v109
  %v133 = vpack.c.b16 %v112, %v111
  %v134 = vpack.c.b16 %v114, %v113
  %v135 = vpack.c.b16 %v116, %v115
  %v136 = vpack.c.b16 %v118, %v117
  %v137 = vpack.c.b16 %v120, %v119
  %v138 = vpack.c.b16 %v122, %v121
  %v147 = vunpack.c.l.b16 %v47
  %v148 = vunpack.c.l.b16 %v48
  %v149 = vunpack.c.l.b16 %v49
  %v150 = vunpack.c.l.b16 %v50
  %v151 = vunpack.c.l.b16 %v51
  %v152 = vunpack.c.l.b16 %v52
  %v153 = vunpack.c.l.b16 %v53
  %v154 = vunpack.c.l.b16 %v54
  %v155 = vpack.c.b16 %v148, %v147
  %v156 = vpack.c.b16 %v150, %v149
  %v157 = vpack.c.b16 %v152, %v151
  %v158 = vpack.c.b16 %v154, %v153
  %vm163 = vcmask 523264
  %v165 = vsel %vm163, %v123, 0
  %v168 = vsel %vm163, %v124, 0
  %v171 = vsel %vm163, %v125, 0
  %v174 = vsel %vm163, %v126, 0
  %v177 = vsel %vm163, %v127, 0
  %v180 = vsel %vm163, %v128, 0
  %v183 = vsel %vm163, %v129, 0
  %v186 = vsel %vm163, %v130, 0
  %v189 = vsel %vm163, %v131, 0
  %v192 = vsel %vm163, %v132, 0
  %v195 = vsel %vm163, %v133, 0
  %v198 = vsel %vm163, %v134, 0
  %v201 = vsel %vm163, %v135, 0
  %v204 = vsel %vm163, %v136, 0
  %v207 = vsel %vm163, %v137, 0
  %v210 = vsel %vm163, %v138, 0
  %212 = vmatpush.bf16.msra.mxu0 0
  %213 = vmatpush.bf16.msra.mxu0 0
  %214 = vmatpush.bf16.msra.mxu0 0
  %215 = vmatpush.bf16.msra.mxu0 0
  %216 = vmatpush.bf16.msra.mxu0 %v158
  %217 = vmatpush.bf16.msra.mxu0 %v157
  %218 = vmatpush.bf16.msra.mxu0 %v156
  %219 = vmatpush.bf16.msra.mxu0 %v155
  %220 = vmatmul.bf16.gmra.mxu0 %v165
  %v221 = vpop.f32.mrf.mxu0
  %v222 = vadd.f32 %v57, %v221
  %v223 = vpop.f32.mrf.mxu0
  %v224 = vadd.f32 %v57, %v223
  %225 = vmatmul.bf16.gmra.mxu0 %v168
  %v226 = vpop.f32.mrf.mxu0
  %v227 = vadd.f32 %v57, %v226
  %v228 = vpop.f32.mrf.mxu0
  %v229 = vadd.f32 %v57, %v228
  %230 = vmatmul.bf16.gmra.mxu0 %v171
  %v231 = vpop.f32.mrf.mxu0
  %v232 = vadd.f32 %v57, %v231
  %v233 = vpop.f32.mrf.mxu0
  %v234 = vadd.f32 %v57, %v233
  %235 = vmatmul.bf16.gmra.mxu0 %v174
  %v236 = vpop.f32.mrf.mxu0
  %v237 = vadd.f32 %v57, %v236
  %v238 = vpop.f32.mrf.mxu0
  %v239 = vadd.f32 %v57, %v238
  %240 = vmatmul.bf16.gmra.mxu0 %v177
  %v241 = vpop.f32.mrf.mxu0
  %v242 = vadd.f32 %v57, %v241
  %v243 = vpop.f32.mrf.mxu0
  %v244 = vadd.f32 %v57, %v243
  %245 = vmatmul.bf16.gmra.mxu0 %v180
  %v246 = vpop.f32.mrf.mxu0
  %v247 = vadd.f32 %v57, %v246
  %v248 = vpop.f32.mrf.mxu0
  %v249 = vadd.f32 %v57, %v248
  %250 = vmatmul.bf16.gmra.mxu0 %v183
  %v251 = vpop.f32.mrf.mxu0
  %v252 = vadd.f32 %v57, %v251
  %v253 = vpop.f32.mrf.mxu0
  %v254 = vadd.f32 %v57, %v253
  %255 = vmatmul.bf16.gmra.mxu0 %v186
  %v256 = vpop.f32.mrf.mxu0
  %v257 = vadd.f32 %v57, %v256
  %v258 = vpop.f32.mrf.mxu0
  %v259 = vadd.f32 %v57, %v258
  %260 = vmatmul.bf16.gmra.mxu0 %v189
  %v261 = vpop.f32.mrf.mxu0
  %v262 = vadd.f32 %v57, %v261
  %v263 = vpop.f32.mrf.mxu0
  %v264 = vadd.f32 %v57, %v263
  %265 = vmatmul.bf16.gmra.mxu0 %v192
  %v266 = vpop.f32.mrf.mxu0
  %v267 = vadd.f32 %v57, %v266
  %v268 = vpop.f32.mrf.mxu0
  %v269 = vadd.f32 %v57, %v268
  %270 = vmatmul.bf16.gmra.mxu0 %v195
  %v271 = vpop.f32.mrf.mxu0
  %v272 = vadd.f32 %v57, %v271
  %v273 = vpop.f32.mrf.mxu0
  %v274 = vadd.f32 %v57, %v273
  %275 = vmatmul.bf16.gmra.mxu0 %v198
  %v276 = vpop.f32.mrf.mxu0
  %v277 = vadd.f32 %v57, %v276
  %v278 = vpop.f32.mrf.mxu0
  %v279 = vadd.f32 %v57, %v278
  %280 = vmatmul.bf16.gmra.mxu0 %v201
  %v281 = vpop.f32.mrf.mxu0
  %v282 = vadd.f32 %v57, %v281
  %v283 = vpop.f32.mrf.mxu0
  %v284 = vadd.f32 %v57, %v283
  %285 = vmatmul.bf16.gmra.mxu0 %v204
  %v286 = vpop.f32.mrf.mxu0
  %v287 = vadd.f32 %v57, %v286
  %v288 = vpop.f32.mrf.mxu0
  %v289 = vadd.f32 %v57, %v288
  %290 = vmatmul.bf16.gmra.mxu0 %v207
  %v291 = vpop.f32.mrf.mxu0
  %v292 = vadd.f32 %v57, %v291
  %v293 = vpop.f32.mrf.mxu0
  %v294 = vadd.f32 %v57, %v293
  %295 = vmatmul.bf16.gmra.mxu0 %v210
  %v296 = vpop.f32.mrf.mxu0
  %v297 = vadd.f32 %v57, %v296
  %v298 = vpop.f32.mrf.mxu0
  %v299 = vadd.f32 %v57, %v298
  %300 = vdwg.mxu0
  %301 = vst.msk [vmem:[%s3] sm:$0xff] %vm163, %v222
  %302 = vst.msk [vmem:[%s3 + $0x8] sm:$0xff] %vm163, %v224
  %303 = vst.msk [vmem:[%s3 + $0x10] sm:$0xff] %vm163, %v227
  %304 = vst.msk [vmem:[%s3 + $0x18] sm:$0xff] %vm163, %v229
  %305 = vst.msk [vmem:[%s3 + $0x20] sm:$0xff] %vm163, %v232
  %306 = vst.msk [vmem:[%s3 + $0x28] sm:$0xff] %vm163, %v234
  %307 = vst.msk [vmem:[%s3 + $0x30] sm:$0xff] %vm163, %v237
  %308 = vst.msk [vmem:[%s3 + $0x38] sm:$0xff] %vm163, %v239
  %309 = vst.msk [vmem:[%s3 + $0x40] sm:$0xff] %vm163, %v242
  %310 = vst.msk [vmem:[%s3 + $0x48] sm:$0xff] %vm163, %v244
  %311 = vst.msk [vmem:[%s3 + $0x50] sm:$0xff] %vm163, %v247
  %312 = vst.msk [vmem:[%s3 + $0x58] sm:$0xff] %vm163, %v249
  %313 = vst.msk [vmem:[%s3 + $0x60] sm:$0xff] %vm163, %v252
  %314 = vst.msk [vmem:[%s3 + $0x68] sm:$0xff] %vm163, %v254
  %315 = vst.msk [vmem:[%s3 + $0x70] sm:$0xff] %vm163, %v257
  %316 = vst.msk [vmem:[%s3 + $0x78] sm:$0xff] %vm163, %v259
  %317 = vst.msk [vmem:[%s3 + $0x80] sm:$0xff] %vm163, %v262
  %318 = vst.msk [vmem:[%s3 + $0x88] sm:$0xff] %vm163, %v264
  %319 = vst.msk [vmem:[%s3 + $0x90] sm:$0xff] %vm163, %v267
  %320 = vst.msk [vmem:[%s3 + $0x98] sm:$0xff] %vm163, %v269
  %321 = vst.msk [vmem:[%s3 + $0xa0] sm:$0xff] %vm163, %v272
  %322 = vst.msk [vmem:[%s3 + $0xa8] sm:$0xff] %vm163, %v274
  %323 = vst.msk [vmem:[%s3 + $0xb0] sm:$0xff] %vm163, %v277
  %324 = vst.msk [vmem:[%s3 + $0xb8] sm:$0xff] %vm163, %v279
  %325 = vst.msk [vmem:[%s3 + $0xc0] sm:$0xff] %vm163, %v282
  %326 = vst.msk [vmem:[%s3 + $0xc8] sm:$0xff] %vm163, %v284
  %327 = vst.msk [vmem:[%s3 + $0xd0] sm:$0xff] %vm163, %v287
  %328 = vst.msk [vmem:[%s3 + $0xd8] sm:$0xff] %vm163, %v289
  %329 = vst.msk [vmem:[%s3 + $0xe0] sm:$0xff] %vm163, %v292
  %330 = vst.msk [vmem:[%s3 + $0xe8] sm:$0xff] %vm163, %v294
  %331 = vst.msk [vmem:[%s3 + $0xf0] sm:$0xff] %vm163, %v297
  %332 = vst.msk [vmem:[%s3 + $0xf8] sm:$0xff] %vm163, %v299
  // Predicated region
  $region14: #{dprnn_forward.10} parent=0 // pred_check
    _
  $region15: #{dprnn_forward.10} parent=0 // pred_check_branch
    %334 = sbr.rel (0) target = $region17
  $region16: #{dprnn_forward.10} parent=0 // pred_region
    _
  $region17: #{dprnn_forward.10} parent=0 // pred_fallthru
    _
  // Predicated region
  $region18: #{dprnn_forward.10} parent=0 // pred_check
    _
  $region19: #{dprnn_forward.10} parent=0 // pred_check_branch
    %336 = sbr.rel (0) target = $region21
  $region20: #{dprnn_forward.10} parent=0 // pred_region
    _
  $region21: #{dprnn_forward.10} parent=0 // pred_fallthru
    _

// kernel: dprnn_forward.11
$region0: #{dprnn_forward.11}
  #allocation0 [shape = 'u32[]', space=smem, size = 0x4, offset = 0x4, fixed_abs, tag = 'smem constant byte address 0x4 - core index']
  #allocation1 [shape = 'u32[72,128]{1,0:T(1,128)}', space=vmem, size = 0x9000, scoped, tag = 'internal scratch']
  %s0 = inlined_call_operand.vmem [shape: f32[32,512], index: 0, kind: input, shape index: {}]
  %s1 = inlined_call_operand.vmem [shape: f32[32,512], index: 1, kind: input, shape index: {}]
  %s2 = inlined_call_operand.vmem [shape: f32[32,512], index: 2, kind: output, shape index: {}]
  %s3 = sld [smem:[#allocation0]]
  $region18: #{dprnn_forward.11} parent=0
    _
  %s5 = ssub.s32 1, %s3
  %s6 = scalar_select 0, %s5, %s3
  // Predicated region
  $region2: #{dprnn_forward.11} parent=0 // pred_check
    _
  $region3: #{dprnn_forward.11} parent=0 // pred_check_branch
    %8 = sbr.rel (0) target = $region5
  $region4: #{dprnn_forward.11} parent=0 // pred_region
    _
  $region5: #{dprnn_forward.11} parent=0 // pred_fallthru
    _
  // Predicated region
  $region6: #{dprnn_forward.11} parent=0 // pred_check
    _
  $region7: #{dprnn_forward.11} parent=0 // pred_check_branch
    %10 = sbr.rel (0) target = $region9
  $region8: #{dprnn_forward.11} parent=0 // pred_region
    _
  $region9: #{dprnn_forward.11} parent=0 // pred_fallthru
    _
  %v11 = vld [vmem:[%s0] sm:$0xff]
  %v12 = vld [vmem:[%s0 + $0x8] sm:$0xff]
  %v13 = vld [vmem:[%s0 + $0x10] sm:$0xff]
  %v14 = vld [vmem:[%s0 + $0x18] sm:$0xff]
  %v15 = vld [vmem:[%s0 + $0x20] sm:$0xff]
  %v16 = vld [vmem:[%s0 + $0x28] sm:$0xff]
  %v17 = vld [vmem:[%s0 + $0x30] sm:$0xff]
  %v18 = vld [vmem:[%s0 + $0x38] sm:$0xff]
  %v19 = vld [vmem:[%s0 + $0x40] sm:$0xff]
  %v20 = vld [vmem:[%s0 + $0x48] sm:$0xff]
  %v21 = vld [vmem:[%s0 + $0x50] sm:$0xff]
  %v22 = vld [vmem:[%s0 + $0x58] sm:$0xff]
  %v23 = vld [vmem:[%s0 + $0x60] sm:$0xff]
  %v24 = vld [vmem:[%s0 + $0x68] sm:$0xff]
  %v25 = vld [vmem:[%s0 + $0x70] sm:$0xff]
  %v26 = vld [vmem:[%s0 + $0x78] sm:$0xff]
  %v27 = vadd.f32 %v11, %v12
  %v28 = vadd.f32 %v27, %v13
  %v29 = vadd.f32 %v28, %v14
  %30 = vadd.xlane.f32.xlu0 %v29
  %v31 = vpop.xlane.xlu0 %30
  %v32 = vadd.f32 %v15, %v16
  %v33 = vadd.f32 %v32, %v17
  %v34 = vadd.f32 %v33, %v18
  %35 = vadd.xlane.f32.xlu0 %v34
  %v36 = vpop.xlane.xlu0 %35
  %v37 = vadd.f32 %v19, %v20
  %v38 = vadd.f32 %v37, %v21
  %v39 = vadd.f32 %v38, %v22
  %40 = vadd.xlane.f32.xlu0 %v39
  %v41 = vpop.xlane.xlu0 %40
  %v42 = vadd.f32 %v23, %v24
  %v43 = vadd.f32 %v42, %v25
  %v44 = vadd.f32 %v43, %v26
  %45 = vadd.xlane.f32.xlu0 %v44
  %v46 = vpop.xlane.xlu0 %45
  %v47 = vmul.f32 %v31, 0.001953125
  %v48 = vmul.f32 %v36, 0.001953125
  %v49 = vmul.f32 %v41, 0.001953125
  %v50 = vmul.f32 %v46, 0.001953125
  %v51 = vsub.f32 %v11, %v47
  %v52 = vsub.f32 %v12, %v47
  %v53 = vsub.f32 %v13, %v47
  %v54 = vsub.f32 %v14, %v47
  %v55 = vsub.f32 %v15, %v48
  %v56 = vsub.f32 %v16, %v48
  %v57 = vsub.f32 %v17, %v48
  %v58 = vsub.f32 %v18, %v48
  %v59 = vsub.f32 %v19, %v49
  %v60 = vsub.f32 %v20, %v49
  %v61 = vsub.f32 %v21, %v49
  %v62 = vsub.f32 %v22, %v49
  %v63 = vsub.f32 %v23, %v50
  %v64 = vsub.f32 %v24, %v50
  %v65 = vsub.f32 %v25, %v50
  %v66 = vsub.f32 %v26, %v50
  %v67 = vmul.f32 %v51, %v51
  %v68 = vmul.f32 %v52, %v52
  %v69 = vmul.f32 %v53, %v53
  %v70 = vmul.f32 %v54, %v54
  %v71 = vmul.f32 %v55, %v55
  %v72 = vmul.f32 %v56, %v56
  %v73 = vmul.f32 %v57, %v57
  %v74 = vmul.f32 %v58, %v58
  %v75 = vmul.f32 %v59, %v59
  %v76 = vmul.f32 %v60, %v60
  %v77 = vmul.f32 %v61, %v61
  %v78 = vmul.f32 %v62, %v62
  %v79 = vmul.f32 %v63, %v63
  %v80 = vmul.f32 %v64, %v64
  %v81 = vmul.f32 %v65, %v65
  %v82 = vmul.f32 %v66, %v66
  %v83 = vadd.f32 %v67, %v68
  %v84 = vadd.f32 %v83, %v69
  %v85 = vadd.f32 %v84, %v70
  %86 = vadd.xlane.f32.xlu0 %v85
  %v87 = vpop.xlane.xlu0 %86
  %v88 = vadd.f32 %v71, %v72
  %v89 = vadd.f32 %v88, %v73
  %v90 = vadd.f32 %v89, %v74
  %91 = vadd.xlane.f32.xlu0 %v90
  %v92 = vpop.xlane.xlu0 %91
  %v93 = vadd.f32 %v75, %v76
  %v94 = vadd.f32 %v93, %v77
  %v95 = vadd.f32 %v94, %v78
  %96 = vadd.xlane.f32.xlu0 %v95
  %v97 = vpop.xlane.xlu0 %96
  %v98 = vadd.f32 %v79, %v80
  %v99 = vadd.f32 %v98, %v81
  %v100 = vadd.f32 %v99, %v82
  %101 = vadd.xlane.f32.xlu0 %v100
  %v102 = vpop.xlane.xlu0 %101
  %v103 = vmul.f32 %v87, 0.001953125
  %v104 = vmul.f32 %v92, 0.001953125
  %v105 = vmul.f32 %v97, 0.001953125
  %v106 = vmul.f32 %v102, 0.001953125
  %v107 = vadd.f32 %v103, 1e-08
  %v108 = vadd.f32 %v104, 1e-08
  %v109 = vadd.f32 %v105, 1e-08
  %v110 = vadd.f32 %v106, 1e-08
  %v111 = vrsqrt.pop %v107
  %v112 = vmul.f32 %v111, %v107
  %v113 = vmul.f32 %v112, %v111
  %v114 = vmul.f32 0.5, %v113
  %v115 = vsub.f32 1.5, %v114
  %v116 = vmul.f32 %v111, %v115
  %vm117 = vweird.f32 %v107
  %vm118 = vweird.f32 %v111
  %vm119 = vmor %vm117, %vm118
  %v120 = vsel %vm119, %v111, %v116
  %v121 = vrsqrt.pop %v108
  %v122 = vmul.f32 %v121, %v108
  %v123 = vmul.f32 %v122, %v121
  %v124 = vmul.f32 0.5, %v123
  %v125 = vsub.f32 1.5, %v124
  %v126 = vmul.f32 %v121, %v125
  %vm127 = vweird.f32 %v108
  %vm128 = vweird.f32 %v121
  %vm129 = vmor %vm127, %vm128
  %v130 = vsel %vm129, %v121, %v126
  %v131 = vrsqrt.pop %v109
  %v132 = vmul.f32 %v131, %v109
  %v133 = vmul.f32 %v132, %v131
  %v134 = vmul.f32 0.5, %v133
  %v135 = vsub.f32 1.5, %v134
  %v136 = vmul.f32 %v131, %v135
  %vm137 = vweird.f32 %v109
  %vm138 = vweird.f32 %v131
  %vm139 = vmor %vm137, %vm138
  %v140 = vsel %vm139, %v131, %v136
  %v141 = vrsqrt.pop %v110
  %v142 = vmul.f32 %v141, %v110
  %v143 = vmul.f32 %v142, %v141
  %v144 = vmul.f32 0.5, %v143
  %v145 = vsub.f32 1.5, %v144
  %v146 = vmul.f32 %v141, %v145
  %vm147 = vweird.f32 %v110
  %vm148 = vweird.f32 %v141
  %vm149 = vmor %vm147, %vm148
  %v150 = vsel %vm149, %v141, %v146
  %v151 = vmul.f32 %v51, %v120
  %v152 = vmul.f32 %v52, %v120
  %v153 = vmul.f32 %v53, %v120
  %v154 = vmul.f32 %v54, %v120
  %v155 = vmul.f32 %v55, %v130
  %v156 = vmul.f32 %v56, %v130
  %v157 = vmul.f32 %v57, %v130
  %v158 = vmul.f32 %v58, %v130
  %v159 = vmul.f32 %v59, %v140
  %v160 = vmul.f32 %v60, %v140
  %v161 = vmul.f32 %v61, %v140
  %v162 = vmul.f32 %v62, %v140
  %v163 = vmul.f32 %v63, %v150
  %v164 = vmul.f32 %v64, %v150
  %v165 = vmul.f32 %v65, %v150
  %v166 = vmul.f32 %v66, %v150
  %v167 = vld [vmem:[%s1] sm:$0xff]
  %v168 = vld [vmem:[%s1 + $0x8] sm:$0xff]
  %v169 = vld [vmem:[%s1 + $0x10] sm:$0xff]
  %v170 = vld [vmem:[%s1 + $0x18] sm:$0xff]
  %v171 = vld [vmem:[%s1 + $0x20] sm:$0xff]
  %v172 = vld [vmem:[%s1 + $0x28] sm:$0xff]
  %v173 = vld [vmem:[%s1 + $0x30] sm:$0xff]
  %v174 = vld [vmem:[%s1 + $0x38] sm:$0xff]
  %v175 = vld [vmem:[%s1 + $0x40] sm:$0xff]
  %v176 = vld [vmem:[%s1 + $0x48] sm:$0xff]
  %v177 = vld [vmem:[%s1 + $0x50] sm:$0xff]
  %v178 = vld [vmem:[%s1 + $0x58] sm:$0xff]
  %v179 = vld [vmem:[%s1 + $0x60] sm:$0xff]
  %v180 = vld [vmem:[%s1 + $0x68] sm:$0xff]
  %v181 = vld [vmem:[%s1 + $0x70] sm:$0xff]
  %v182 = vld [vmem:[%s1 + $0x78] sm:$0xff]
  %v183 = vadd.f32 %v151, %v167
  %v184 = vadd.f32 %v152, %v168
  %v185 = vadd.f32 %v153, %v169
  %v186 = vadd.f32 %v154, %v170
  %v187 = vadd.f32 %v155, %v171
  %v188 = vadd.f32 %v156, %v172
  %v189 = vadd.f32 %v157, %v173
  %v190 = vadd.f32 %v158, %v174
  %v191 = vadd.f32 %v159, %v175
  %v192 = vadd.f32 %v160, %v176
  %v193 = vadd.f32 %v161, %v177
  %v194 = vadd.f32 %v162, %v178
  %v195 = vadd.f32 %v163, %v179
  %v196 = vadd.f32 %v164, %v180
  %v197 = vadd.f32 %v165, %v181
  %v198 = vadd.f32 %v166, %v182
  %199 = vst [vmem:[%s2] sm:$0xff] %v183
  %200 = vst [vmem:[%s2 + $0x8] sm:$0xff] %v184
  %201 = vst [vmem:[%s2 + $0x10] sm:$0xff] %v185
  %202 = vst [vmem:[%s2 + $0x18] sm:$0xff] %v186
  %203 = vst [vmem:[%s2 + $0x20] sm:$0xff] %v187
  %204 = vst [vmem:[%s2 + $0x28] sm:$0xff] %v188
  %205 = vst [vmem:[%s2 + $0x30] sm:$0xff] %v189
  %206 = vst [vmem:[%s2 + $0x38] sm:$0xff] %v190
  %207 = vst [vmem:[%s2 + $0x40] sm:$0xff] %v191
  %208 = vst [vmem:[%s2 + $0x48] sm:$0xff] %v192
  %209 = vst [vmem:[%s2 + $0x50] sm:$0xff] %v193
  %210 = vst [vmem:[%s2 + $0x58] sm:$0xff] %v194
  %211 = vst [vmem:[%s2 + $0x60] sm:$0xff] %v195
  %212 = vst [vmem:[%s2 + $0x68] sm:$0xff] %v196
  %213 = vst [vmem:[%s2 + $0x70] sm:$0xff] %v197
  %214 = vst [vmem:[%s2 + $0x78] sm:$0xff] %v198
  // Predicated region
  $region10: #{dprnn_forward.11} parent=0 // pred_check
    _
  $region11: #{dprnn_forward.11} parent=0 // pred_check_branch
    %216 = sbr.rel (0) target = $region13
  $region12: #{dprnn_forward.11} parent=0 // pred_region
    _
  $region13: #{dprnn_forward.11} parent=0 // pred_fallthru
    _
  // Predicated region
  $region14: #{dprnn_forward.11} parent=0 // pred_check
    _
  $region15: #{dprnn_forward.11} parent=0 // pred_check_branch
    %218 = sbr.rel (0) target = $region17
  $region16: #{dprnn_forward.11} parent=0 // pred_region
    _
  $region17: #{dprnn_forward.11} parent=0 // pred_fallthru
    _

// kernel: dprnn_forward.13
$region0: #{dprnn_forward.13}
  #allocation0 [shape = 'u32[]', space=smem, size = 0x4, offset = 0x4, fixed_abs, tag = 'smem constant byte address 0x4 - core index']
  #allocation1 [shape = 'u32[72,128]{1,0:T(1,128)}', space=vmem, size = 0x9000, scoped, tag = 'internal scratch']
  #allocation2 [shape = 'f32[32,64]{1,0:T(8,128)}', space=vmem, size = 0x4000, scoped, tag = 'scratch operand']
  #allocation3 [shape = 'f32[32,64]{1,0:T(8,128)}', space=vmem, size = 0x4000, scoped, tag = 'scratch operand']
  %s0 = inlined_call_operand.vmem [shape: f32[8,32,256], index: 0, kind: input, shape index: {}]
  %s1 = inlined_call_operand.vmem [shape: bf16[64,256], index: 1, kind: input, shape index: {}]
  %s2 = inlined_call_operand.vmem [shape: f32[8,32,64], index: 2, kind: output, shape index: {}]
  %s3 = sld [smem:[#allocation0]]
  $region25: #{dprnn_forward.13} parent=0
    _
  %s5 = ssub.s32 1, %s3
  %s6 = scalar_select 0, %s5, %s3
  // Predicated region
  $region2: #{dprnn_forward.13} parent=0 // pred_check
    _
  $region3: #{dprnn_forward.13} parent=0 // pred_check_branch
    %8 = sbr.rel (0) target = $region5
  $region4: #{dprnn_forward.13} parent=0 // pred_region
    _
  $region5: #{dprnn_forward.13} parent=0 // pred_fallthru
    _
  // Predicated region
  $region6: #{dprnn_forward.13} parent=0 // pred_check
    _
  $region7: #{dprnn_forward.13} parent=0 // pred_check_branch
    %10 = sbr.rel (0) target = $region9
  $region8: #{dprnn_forward.13} parent=0 // pred_region
    _
  $region9: #{dprnn_forward.13} parent=0 // pred_fallthru
    _
  %vm12 = vcmask 523264
  %13 = vst.msk [vmem:[#allocation2] sm:$0xff] %vm12, 0.0
  %14 = vst.msk [vmem:[#allocation2 + $0x8] sm:$0xff] %vm12, 0.0
  %15 = vst.msk [vmem:[#allocation2 + $0x10] sm:$0xff] %vm12, 0.0
  %16 = vst.msk [vmem:[#allocation2 + $0x18] sm:$0xff] %vm12, 0.0
  %17 = vst.msk [vmem:[#allocation3] sm:$0xff] %vm12, 0.0
  %18 = vst.msk [vmem:[#allocation3 + $0x8] sm:$0xff] %vm12, 0.0
  %19 = vst.msk [vmem:[#allocation3 + $0x10] sm:$0xff] %vm12, 0.0
  %20 = vst.msk [vmem:[#allocation3 + $0x18] sm:$0xff] %vm12, 0.0
  loop: start=0, step=1, limit=8
  $region10: #{dprnn_forward.13} parent=0 // loop_pre_header
    _
  $region11: #{dprnn_forward.13} parent=0 // loop_header
    %s22 = sphi 0, %s26
    %p23 = scmp.ge.s32.totalorder %s22, 8
  $region12: #{dprnn_forward.13} parent=0 // loop_header_branch
    %25 = sbr.rel (%p23) target = $region16
  $region13: #{dprnn_forward.13} parent=0 // loop_body
    %v27 = vld [vmem:[#allocation2] sm:$0xff]
    %v28 = vld [vmem:[#allocation2 + $0x8] sm:$0xff]
    %v29 = vld [vmem:[#allocation2 + $0x10] sm:$0xff]
    %v30 = vld [vmem:[#allocation2 + $0x18] sm:$0xff]
    %s31 = smul.u32 %s22, 8
    %s32 = smul.addr %s31, 8
    %s33 = scalar_lea.vmem %s0, %s32
    %v34 = vld [vmem:[%s33] sm:$0xff]
    %v35 = vld [vmem:[%s33 + $0x8] sm:$0xff]
    %v36 = vld [vmem:[%s33 + $0x10] sm:$0xff]
    %v37 = vld [vmem:[%s33 + $0x18] sm:$0xff]
    %v38 = vld [vmem:[%s33 + $0x20] sm:$0xff]
    %v39 = vld [vmem:[%s33 + $0x28] sm:$0xff]
    %v40 = vld [vmem:[%s33 + $0x30] sm:$0xff]
    %v41 = vld [vmem:[%s33 + $0x38] sm:$0xff]
    %v42 = vpack.c.bf16 %v28, %v27
    %v43 = vpack.c.bf16 %v30, %v29
    %v44 = vld [vmem:[%s1] sm:$0xff]
    %v45 = vld [vmem:[%s1 + $0x8] sm:$0xff]
    %v46 = vld [vmem:[%s1 + $0x10] sm:$0xff]
    %v47 = vld [vmem:[%s1 + $0x18] sm:$0xff]
    %v48 = vld [vmem:[%s1 + $0x20] sm:$0xff]
    %v49 = vld [vmem:[%s1 + $0x28] sm:$0xff]
    %v50 = vld [vmem:[%s1 + $0x30] sm:$0xff]
    %v51 = vld [vmem:[%s1 + $0x38] sm:$0xff]
    %v60 = vunpack.c.l.b16 %v44
    %v61 = vunpack.c.h.b16 %v44
    %v62 = vunpack.c.l.b16 %v45
    %v63 = vunpack.c.h.b16 %v45
    %v64 = vunpack.c.l.b16 %v46
    %v65 = vunpack.c.h.b16 %v46
    %v66 = vunpack.c.l.b16 %v47
    %v67 = vunpack.c.h.b16 %v47
    %v68 = vunpack.c.l.b16 %v48
    %v69 = vunpack.c.h.b16 %v48
    %v70 = vunpack.c.l.b16 %v49
    %v71 = vunpack.c.h.b16 %v49
    %v72 = vunpack.c.l.b16 %v50
    %v73 = vunpack.c.h.b16 %v50
    %v74 = vunpack.c.l.b16 %v51
    %v75 = vunpack.c.h.b16 %v51
    %v76 = vpack.c.b16 %v62, %v60
    %v77 = vpack.c.b16 %v63, %v61
    %v78 = vpack.c.b16 %v66, %v64
    %v79 = vpack.c.b16 %v67, %v65
    %v80 = vpack.c.b16 %v70, %v68
    %v81 = vpack.c.b16 %v71, %v69
    %v82 = vpack.c.b16 %v74, %v72
    %v83 = vpack.c.b16 %v75, %v73
    %v93 = vsel %vm12, %v42, 0
    %v96 = vsel %vm12, %v43, 0
    %98 = vmatpush.bf16.msra.mxu0 0
    %99 = vmatpush.bf16.msra.mxu0 0
    %100 = vmatpush.bf16.msra.mxu0 0
    %101 = vmatpush.bf16.msra.mxu0 0
    %102 = vmatpush.bf16.msra.mxu0 %v82
    %103 = vmatpush.bf16.msra.mxu0 %v80
    %104 = vmatpush.bf16.msra.mxu0 %v78
    %105 = vmatpush.bf16.msra.mxu0 %v76
    %106 = vmatmul.bf16.gmra.mxu0 %v93
    %v107 = vpop.f32.mrf.mxu0
    %v108 = vadd.f32 0.0, %v107
    %v109 = vpop.f32.mrf.mxu0
    %v110 = vadd.f32 0.0, %v109
    %111 = vmatmul.bf16.gmra.mxu0 %v96
    %v112 = vpop.f32.mrf.mxu0
    %v113 = vadd.f32 0.0, %v112
    %v114 = vpop.f32.mrf.mxu0
    %v115 = vadd.f32 0.0, %v114
    %116 = vdwg.mxu0
    %117 = vmatpush.bf16.msra.mxu0 0
    %118 = vmatpush.bf16.msra.mxu0 0
    %119 = vmatpush.bf16.msra.mxu0 0
    %120 = vmatpush.bf16.msra.mxu0 0
    %121 = vmatpush.bf16.msra.mxu0 %v83
    %122 = vmatpush.bf16.msra.mxu0 %v81
    %123 = vmatpush.bf16.msra.mxu0 %v79
    %124 = vmatpush.bf16.msra.mxu0 %v77
    %125 = vmatmul.bf16.gmra.mxu0 %v93
    %v126 = vpop.f32.mrf.mxu0
    %v127 = vadd.f32 0.0, %v126
    %v128 = vpop.f32.mrf.mxu0
    %v129 = vadd.f32 0.0, %v128
    %130 = vmatmul.bf16.gmra.mxu0 %v96
    %v131 = vpop.f32.mrf.mxu0
    %v132 = vadd.f32 0.0, %v131
    %v133 = vpop.f32.mrf.mxu0
    %v134 = vadd.f32 0.0, %v133
    %135 = vdwg.mxu0
    %v136 = vadd.f32 %v34, %v108
    %v137 = vadd.f32 %v35, %v127
    %v138 = vadd.f32 %v36, %v110
    %v139 = vadd.f32 %v37, %v129
    %v140 = vadd.f32 %v38, %v113
    %v141 = vadd.f32 %v39, %v132
    %v142 = vadd.f32 %v40, %v115
    %v143 = vadd.f32 %v41, %v134
    %v144 = vxor.u32 %v136, 2147483648
    %v145 = vxor.u32 %v138, 2147483648
    %v146 = vxor.u32 %v140, 2147483648
    %v147 = vxor.u32 %v142, 2147483648
    %v148 = vmul.f32 %v144, 1.442695
    %v149 = vpow.pop %v148
    %v150 = vmul.f32 %v145, 1.442695
    %v151 = vpow.pop %v150
    %v152 = vmul.f32 %v146, 1.442695
    %v153 = vpow.pop %v152
    %v154 = vmul.f32 %v147, 1.442695
    %v155 = vpow.pop %v154
    %v156 = vadd.f32 %v149, 1.0
    %v157 = vadd.f32 %v151, 1.0
    %v158 = vadd.f32 %v153, 1.0
    %v159 = vadd.f32 %v155, 1.0
    %v160 = vrcp.pop %v156
    %v161 = vmul.f32 %v156, %v160
    %v162 = vsub.f32 1.0, %v161
    %v163 = vmul.f32 %v160, %v162
    %v164 = vadd.f32 %v160, %v163
    %vm165 = vweird.f32 %v156
    %vm166 = vweird.f32 %v160
    %vm167 = vmor %vm165, %vm166
    %v168 = vsel %vm167, %v160, %v164
    %v169 = vand.u32 2147483647, %v156
    %vm170 = vcmp.eq.f32.partialorder %v169, 8.507059e+37
    %v171 = vand.u32 %v156, 2147483648
    %v172 = vor.u32 1.1754944e-38, %v171
    %v173 = vsel %vm170, %v172, %v168
    %v174 = vmul.f32 1.0, %v173
    %v175 = vrcp.pop %v157
    %v176 = vmul.f32 %v157, %v175
    %v177 = vsub.f32 1.0, %v176
    %v178 = vmul.f32 %v175, %v177
    %v179 = vadd.f32 %v175, %v178
    %vm180 = vweird.f32 %v157
    %vm181 = vweird.f32 %v175
    %vm182 = vmor %vm180, %vm181
    %v183 = vsel %vm182, %v175, %v179
    %v184 = vand.u32 2147483647, %v157
    %vm185 = vcmp.eq.f32.partialorder %v184, 8.507059e+37
    %v186 = vand.u32 %v157, 2147483648
    %v187 = vor.u32 1.1754944e-38, %v186
    %v188 = vsel %vm185, %v187, %v183
    %v189 = vmul.f32 1.0, %v188
    %v190 = vrcp.pop %v158
    %v191 = vmul.f32 %v158, %v190
    %v192 = vsub.f32 1.0, %v191
    %v193 = vmul.f32 %v190, %v192
    %v194 = vadd.f32 %v190, %v193
    %vm195 = vweird.f32 %v158
    %vm196 = vweird.f32 %v190
    %vm197 = vmor %vm195, %vm196
    %v198 = vsel %vm197, %v190, %v194
    %v199 = vand.u32 2147483647, %v158
    %vm200 = vcmp.eq.f32.partialorder %v199, 8.507059e+37
    %v201 = vand.u32 %v158, 2147483648
    %v202 = vor.u32 1.1754944e-38, %v201
    %v203 = vsel %vm200, %v202, %v198
    %v204 = vmul.f32 1.0, %v203
    %v205 = vrcp.pop %v159
    %v206 = vmul.f32 %v159, %v205
    %v207 = vsub.f32 1.0, %v206
    %v208 = vmul.f32 %v205, %v207
    %v209 = vadd.f32 %v205, %v208
    %vm210 = vweird.f32 %v159
    %vm211 = vweird.f32 %v205
    %vm212 = vmor %vm210, %vm211
    %v213 = vsel %vm212, %v205, %v209
    %v214 = vand.u32 2147483647, %v159
    %vm215 = vcmp.eq.f32.partialorder %v214, 8.507059e+37
    %v216 = vand.u32 %v159, 2147483648
    %v217 = vor.u32 1.1754944e-38, %v216
    %v218 = vsel %vm215, %v217, %v213
    %v219 = vmul.f32 1.0, %v218
    %v220 = vtanh.pop %v137
    %v221 = vtanh.pop %v139
    %v222 = vtanh.pop %v141
    %v223 = vtanh.pop %v143
    %v224 = vxor.u32 %v137, 2147483648
    %v225 = vxor.u32 %v139, 2147483648
    %v226 = vxor.u32 %v141, 2147483648
    %v227 = vxor.u32 %v143, 2147483648
    %v228 = vmul.f32 %v224, 1.442695
    %v229 = vpow.pop %v228
    %v230 = vmul.f32 %v225, 1.442695
    %v231 = vpow.pop %v230
    %v232 = vmul.f32 %v226, 1.442695
    %v233 = vpow.pop %v232
    %v234 = vmul.f32 %v227, 1.442695
    %v235 = vpow.pop %v234
    %v236 = vadd.f32 %v229, 1.0
    %v237 = vadd.f32 %v231, 1.0
    %v238 = vadd.f32 %v233, 1.0
    %v239 = vadd.f32 %v235, 1.0
    %v240 = vrcp.pop %v236
    %v241 = vmul.f32 %v236, %v240
    %v242 = vsub.f32 1.0, %v241
    %v243 = vmul.f32 %v240, %v242
    %v244 = vadd.f32 %v240, %v243
    %vm245 = vweird.f32 %v236
    %vm246 = vweird.f32 %v240
    %vm247 = vmor %vm245, %vm246
    %v248 = vsel %vm247, %v240, %v244
    %v249 = vand.u32 2147483647, %v236
    %vm250 = vcmp.eq.f32.partialorder %v249, 8.507059e+37
    %v251 = vand.u32 %v236, 2147483648
    %v252 = vor.u32 1.1754944e-38, %v251
    %v253 = vsel %vm250, %v252, %v248
    %v254 = vmul.f32 1.0, %v253
    %v255 = vrcp.pop %v237
    %v256 = vmul.f32 %v237, %v255
    %v257 = vsub.f32 1.0, %v256
    %v258 = vmul.f32 %v255, %v257
    %v259 = vadd.f32 %v255, %v258
    %vm260 = vweird.f32 %v237
    %vm261 = vweird.f32 %v255
    %vm262 = vmor %vm260, %vm261
    %v263 = vsel %vm262, %v255, %v259
    %v264 = vand.u32 2147483647, %v237
    %vm265 = vcmp.eq.f32.partialorder %v264, 8.507059e+37
    %v266 = vand.u32 %v237, 2147483648
    %v267 = vor.u32 1.1754944e-38, %v266
    %v268 = vsel %vm265, %v267, %v263
    %v269 = vmul.f32 1.0, %v268
    %v270 = vrcp.pop %v238
    %v271 = vmul.f32 %v238, %v270
    %v272 = vsub.f32 1.0, %v271
    %v273 = vmul.f32 %v270, %v272
    %v274 = vadd.f32 %v270, %v273
    %vm275 = vweird.f32 %v238
    %vm276 = vweird.f32 %v270
    %vm277 = vmor %vm275, %vm276
    %v278 = vsel %vm277, %v270, %v274
    %v279 = vand.u32 2147483647, %v238
    %vm280 = vcmp.eq.f32.partialorder %v279, 8.507059e+37
    %v281 = vand.u32 %v238, 2147483648
    %v282 = vor.u32 1.1754944e-38, %v281
    %v283 = vsel %vm280, %v282, %v278
    %v284 = vmul.f32 1.0, %v283
    %v285 = vrcp.pop %v239
    %v286 = vmul.f32 %v239, %v285
    %v287 = vsub.f32 1.0, %v286
    %v288 = vmul.f32 %v285, %v287
    %v289 = vadd.f32 %v285, %v288
    %vm290 = vweird.f32 %v239
    %vm291 = vweird.f32 %v285
    %vm292 = vmor %vm290, %vm291
    %v293 = vsel %vm292, %v285, %v289
    %v294 = vand.u32 2147483647, %v239
    %vm295 = vcmp.eq.f32.partialorder %v294, 8.507059e+37
    %v296 = vand.u32 %v239, 2147483648
    %v297 = vor.u32 1.1754944e-38, %v296
    %v298 = vsel %vm295, %v297, %v293
    %v299 = vmul.f32 1.0, %v298
    %v300 = vld [vmem:[#allocation3] sm:$0xff]
    %v301 = vld [vmem:[#allocation3 + $0x8] sm:$0xff]
    %v302 = vld [vmem:[#allocation3 + $0x10] sm:$0xff]
    %v303 = vld [vmem:[#allocation3 + $0x18] sm:$0xff]
    %308 = vrot.lane.b32.xlu0 %v300, 64
    %v309 = vpop.permute.xlu0 %308
    %310 = vrot.lane.b32.xlu0 %v301, 64
    %v311 = vpop.permute.xlu0 %310
    %312 = vrot.lane.b32.xlu0 %v302, 64
    %v313 = vpop.permute.xlu0 %312
    %314 = vrot.lane.b32.xlu0 %v303, 64
    %v315 = vpop.permute.xlu0 %314
    %v320 = vmul.f32 %v174, %v309
    %v321 = vmul.f32 %v189, %v311
    %v322 = vmul.f32 %v204, %v313
    %v323 = vmul.f32 %v219, %v315
    %v324 = vmul.f32 %v174, %v220
    %v325 = vmul.f32 %v189, %v221
    %v326 = vmul.f32 %v204, %v222
    %v327 = vmul.f32 %v219, %v223
    %332 = vrot.lane.b32.xlu0 %v324, 64
    %v333 = vpop.permute.xlu0 %332
    %334 = vrot.lane.b32.xlu0 %v325, 64
    %v335 = vpop.permute.xlu0 %334
    %336 = vrot.lane.b32.xlu0 %v326, 64
    %v337 = vpop.permute.xlu0 %336
    %338 = vrot.lane.b32.xlu0 %v327, 64
    %v339 = vpop.permute.xlu0 %338
    %v344 = vadd.f32 %v320, %v333
    %v345 = vadd.f32 %v321, %v335
    %v346 = vadd.f32 %v322, %v337
    %v347 = vadd.f32 %v323, %v339
    %352 = vrot.lane.b32.xlu0 %v344, 64
    %v353 = vpop.permute.xlu0 %352
    %354 = vrot.lane.b32.xlu0 %v345, 64
    %v355 = vpop.permute.xlu0 %354
    %356 = vrot.lane.b32.xlu0 %v346, 64
    %v357 = vpop.permute.xlu0 %356
    %358 = vrot.lane.b32.xlu0 %v347, 64
    %v359 = vpop.permute.xlu0 %358
    %364 = vst.msk [vmem:[#allocation3] sm:$0xff] %vm12, %v353
    %365 = vst.msk [vmem:[#allocation3 + $0x8] sm:$0xff] %vm12, %v355
    %366 = vst.msk [vmem:[#allocation3 + $0x10] sm:$0xff] %vm12, %v357
    %367 = vst.msk [vmem:[#allocation3 + $0x18] sm:$0xff] %vm12, %v359
    %v368 = vtanh.pop %v344
    %v369 = vtanh.pop %v345
    %v370 = vtanh.pop %v346
    %v371 = vtanh.pop %v347
    %v372 = vmul.f32 %v254, %v368
    %v373 = vmul.f32 %v269, %v369
    %v374 = vmul.f32 %v284, %v370
    %v375 = vmul.f32 %v299, %v371
    %380 = vrot.lane.b32.xlu0 %v372, 64
    %v381 = vpop.permute.xlu0 %380
    %382 = vrot.lane.b32.xlu0 %v373, 64
    %v383 = vpop.permute.xlu0 %382
    %384 = vrot.lane.b32.xlu0 %v374, 64
    %v385 = vpop.permute.xlu0 %384
    %386 = vrot.lane.b32.xlu0 %v375, 64
    %v387 = vpop.permute.xlu0 %386
    %392 = vst.msk [vmem:[#allocation2] sm:$0xff] %vm12, %v381
    %393 = vst.msk [vmem:[#allocation2 + $0x8] sm:$0xff] %vm12, %v383
    %394 = vst.msk [vmem:[#allocation2 + $0x10] sm:$0xff] %vm12, %v385
    %395 = vst.msk [vmem:[#allocation2 + $0x18] sm:$0xff] %vm12, %v387
    %v396 = vld [vmem:[#allocation2] sm:$0xff]
    %v397 = vld [vmem:[#allocation2 + $0x8] sm:$0xff]
    %v398 = vld [vmem:[#allocation2 + $0x10] sm:$0xff]
    %v399 = vld [vmem:[#allocation2 + $0x18] sm:$0xff]
    %s400 = smul.u32 %s22, 32
    %s401 = scalar_lea.vmem %s2, %s400
    %402 = vst.msk [vmem:[%s401] sm:$0xff] %vm12, %v396
    %403 = vst.msk [vmem:[%s401 + $0x8] sm:$0xff] %vm12, %v397
    %404 = vst.msk [vmem:[%s401 + $0x10] sm:$0xff] %vm12, %v398
    %405 = vst.msk [vmem:[%s401 + $0x18] sm:$0xff] %vm12, %v399
  $region14: #{dprnn_forward.13} parent=0 // loop_footer
    %s26 = sadd.s32 1, %s22
  $region15: #{dprnn_forward.13} parent=0 // loop_footer_branch
    %21 = sbr.rel target = $region11
  $region16: #{dprnn_forward.13} parent=0 // loop_exit
    _
  // Predicated region
  $region17: #{dprnn_forward.13} parent=0 // pred_check
    _
  $region18: #{dprnn_forward.13} parent=0 // pred_check_branch
    %407 = sbr.rel (0) target = $region20
  $region19: #{dprnn_forward.13} parent=0 // pred_region
    _
  $region20: #{dprnn_forward.13} parent=0 // pred_fallthru
    _
  // Predicated region
  $region21: #{dprnn_forward.13} parent=0 // pred_check
    _
  $region22: #{dprnn_forward.13} parent=0 // pred_check_branch
    %409 = sbr.rel (0) target = $region24
  $region23: #{dprnn_forward.13} parent=0 // pred_region
    _
  $region24: #{dprnn_forward.13} parent=0 // pred_fallthru
    _

// kernel: dprnn_forward.15
$region0: #{dprnn_forward.15}
  #allocation0 [shape = 'u32[]', space=smem, size = 0x4, offset = 0x4, fixed_abs, tag = 'smem constant byte address 0x4 - core index']
  #allocation1 [shape = 'u32[72,128]{1,0:T(1,128)}', space=vmem, size = 0x9000, scoped, tag = 'internal scratch']
  %s0 = inlined_call_operand.vmem [shape: f32[128,128], index: 0, kind: input, shape index: {}]
  %s1 = inlined_call_operand.vmem [shape: f32[128,128], index: 1, kind: input, shape index: {}]
  %s2 = inlined_call_operand.vmem [shape: f32[128,128], index: 2, kind: output, shape index: {}]
  %s3 = sld [smem:[#allocation0]]
  $region18: #{dprnn_forward.15} parent=0
    _
  %s5 = ssub.s32 1, %s3
  %s6 = scalar_select 0, %s5, %s3
  // Predicated region
  $region2: #{dprnn_forward.15} parent=0 // pred_check
    _
  $region3: #{dprnn_forward.15} parent=0 // pred_check_branch
    %8 = sbr.rel (0) target = $region5
  $region4: #{dprnn_forward.15} parent=0 // pred_region
    _
  $region5: #{dprnn_forward.15} parent=0 // pred_fallthru
    _
  // Predicated region
  $region6: #{dprnn_forward.15} parent=0 // pred_check
    _
  $region7: #{dprnn_forward.15} parent=0 // pred_check_branch
    %10 = sbr.rel (0) target = $region9
  $region8: #{dprnn_forward.15} parent=0 // pred_region
    _
  $region9: #{dprnn_forward.15} parent=0 // pred_fallthru
    _
  %v11 = vld [vmem:[%s0] sm:$0xff]
  %v12 = vld [vmem:[%s0 + $0x8] sm:$0xff]
  %v13 = vld [vmem:[%s0 + $0x10] sm:$0xff]
  %v14 = vld [vmem:[%s0 + $0x18] sm:$0xff]
  %v15 = vld [vmem:[%s0 + $0x20] sm:$0xff]
  %v16 = vld [vmem:[%s0 + $0x28] sm:$0xff]
  %v17 = vld [vmem:[%s0 + $0x30] sm:$0xff]
  %v18 = vld [vmem:[%s0 + $0x38] sm:$0xff]
  %v19 = vld [vmem:[%s0 + $0x40] sm:$0xff]
  %v20 = vld [vmem:[%s0 + $0x48] sm:$0xff]
  %v21 = vld [vmem:[%s0 + $0x50] sm:$0xff]
  %v22 = vld [vmem:[%s0 + $0x58] sm:$0xff]
  %v23 = vld [vmem:[%s0 + $0x60] sm:$0xff]
  %v24 = vld [vmem:[%s0 + $0x68] sm:$0xff]
  %v25 = vld [vmem:[%s0 + $0x70] sm:$0xff]
  %v26 = vld [vmem:[%s0 + $0x78] sm:$0xff]
  %27 = vadd.xlane.f32.xlu0 %v11
  %v28 = vpop.xlane.xlu0 %27
  %29 = vadd.xlane.f32.xlu0 %v12
  %v30 = vpop.xlane.xlu0 %29
  %31 = vadd.xlane.f32.xlu0 %v13
  %v32 = vpop.xlane.xlu0 %31
  %33 = vadd.xlane.f32.xlu0 %v14
  %v34 = vpop.xlane.xlu0 %33
  %35 = vadd.xlane.f32.xlu0 %v15
  %v36 = vpop.xlane.xlu0 %35
  %37 = vadd.xlane.f32.xlu0 %v16
  %v38 = vpop.xlane.xlu0 %37
  %39 = vadd.xlane.f32.xlu0 %v17
  %v40 = vpop.xlane.xlu0 %39
  %41 = vadd.xlane.f32.xlu0 %v18
  %v42 = vpop.xlane.xlu0 %41
  %43 = vadd.xlane.f32.xlu0 %v19
  %v44 = vpop.xlane.xlu0 %43
  %45 = vadd.xlane.f32.xlu0 %v20
  %v46 = vpop.xlane.xlu0 %45
  %47 = vadd.xlane.f32.xlu0 %v21
  %v48 = vpop.xlane.xlu0 %47
  %49 = vadd.xlane.f32.xlu0 %v22
  %v50 = vpop.xlane.xlu0 %49
  %51 = vadd.xlane.f32.xlu0 %v23
  %v52 = vpop.xlane.xlu0 %51
  %53 = vadd.xlane.f32.xlu0 %v24
  %v54 = vpop.xlane.xlu0 %53
  %55 = vadd.xlane.f32.xlu0 %v25
  %v56 = vpop.xlane.xlu0 %55
  %57 = vadd.xlane.f32.xlu0 %v26
  %v58 = vpop.xlane.xlu0 %57
  %v59 = vmul.f32 %v28, 0.0078125
  %v60 = vmul.f32 %v30, 0.0078125
  %v61 = vmul.f32 %v32, 0.0078125
  %v62 = vmul.f32 %v34, 0.0078125
  %v63 = vmul.f32 %v36, 0.0078125
  %v64 = vmul.f32 %v38, 0.0078125
  %v65 = vmul.f32 %v40, 0.0078125
  %v66 = vmul.f32 %v42, 0.0078125
  %v67 = vmul.f32 %v44, 0.0078125
  %v68 = vmul.f32 %v46, 0.0078125
  %v69 = vmul.f32 %v48, 0.0078125
  %v70 = vmul.f32 %v50, 0.0078125
  %v71 = vmul.f32 %v52, 0.0078125
  %v72 = vmul.f32 %v54, 0.0078125
  %v73 = vmul.f32 %v56, 0.0078125
  %v74 = vmul.f32 %v58, 0.0078125
  %v75 = vsub.f32 %v11, %v59
  %v76 = vsub.f32 %v12, %v60
  %v77 = vsub.f32 %v13, %v61
  %v78 = vsub.f32 %v14, %v62
  %v79 = vsub.f32 %v15, %v63
  %v80 = vsub.f32 %v16, %v64
  %v81 = vsub.f32 %v17, %v65
  %v82 = vsub.f32 %v18, %v66
  %v83 = vsub.f32 %v19, %v67
  %v84 = vsub.f32 %v20, %v68
  %v85 = vsub.f32 %v21, %v69
  %v86 = vsub.f32 %v22, %v70
  %v87 = vsub.f32 %v23, %v71
  %v88 = vsub.f32 %v24, %v72
  %v89 = vsub.f32 %v25, %v73
  %v90 = vsub.f32 %v26, %v74
  %v91 = vmul.f32 %v75, %v75
  %v92 = vmul.f32 %v76, %v76
  %v93 = vmul.f32 %v77, %v77
  %v94 = vmul.f32 %v78, %v78
  %v95 = vmul.f32 %v79, %v79
  %v96 = vmul.f32 %v80, %v80
  %v97 = vmul.f32 %v81, %v81
  %v98 = vmul.f32 %v82, %v82
  %v99 = vmul.f32 %v83, %v83
  %v100 = vmul.f32 %v84, %v84
  %v101 = vmul.f32 %v85, %v85
  %v102 = vmul.f32 %v86, %v86
  %v103 = vmul.f32 %v87, %v87
  %v104 = vmul.f32 %v88, %v88
  %v105 = vmul.f32 %v89, %v89
  %v106 = vmul.f32 %v90, %v90
  %107 = vadd.xlane.f32.xlu0 %v91
  %v108 = vpop.xlane.xlu0 %107
  %109 = vadd.xlane.f32.xlu0 %v92
  %v110 = vpop.xlane.xlu0 %109
  %111 = vadd.xlane.f32.xlu0 %v93
  %v112 = vpop.xlane.xlu0 %111
  %113 = vadd.xlane.f32.xlu0 %v94
  %v114 = vpop.xlane.xlu0 %113
  %115 = vadd.xlane.f32.xlu0 %v95
  %v116 = vpop.xlane.xlu0 %115
  %117 = vadd.xlane.f32.xlu0 %v96
  %v118 = vpop.xlane.xlu0 %117
  %119 = vadd.xlane.f32.xlu0 %v97
  %v120 = vpop.xlane.xlu0 %119
  %121 = vadd.xlane.f32.xlu0 %v98
  %v122 = vpop.xlane.xlu0 %121
  %123 = vadd.xlane.f32.xlu0 %v99
  %v124 = vpop.xlane.xlu0 %123
  %125 = vadd.xlane.f32.xlu0 %v100
  %v126 = vpop.xlane.xlu0 %125
  %127 = vadd.xlane.f32.xlu0 %v101
  %v128 = vpop.xlane.xlu0 %127
  %129 = vadd.xlane.f32.xlu0 %v102
  %v130 = vpop.xlane.xlu0 %129
  %131 = vadd.xlane.f32.xlu0 %v103
  %v132 = vpop.xlane.xlu0 %131
  %133 = vadd.xlane.f32.xlu0 %v104
  %v134 = vpop.xlane.xlu0 %133
  %135 = vadd.xlane.f32.xlu0 %v105
  %v136 = vpop.xlane.xlu0 %135
  %137 = vadd.xlane.f32.xlu0 %v106
  %v138 = vpop.xlane.xlu0 %137
  %v139 = vmul.f32 %v108, 0.0078125
  %v140 = vmul.f32 %v110, 0.0078125
  %v141 = vmul.f32 %v112, 0.0078125
  %v142 = vmul.f32 %v114, 0.0078125
  %v143 = vmul.f32 %v116, 0.0078125
  %v144 = vmul.f32 %v118, 0.0078125
  %v145 = vmul.f32 %v120, 0.0078125
  %v146 = vmul.f32 %v122, 0.0078125
  %v147 = vmul.f32 %v124, 0.0078125
  %v148 = vmul.f32 %v126, 0.0078125
  %v149 = vmul.f32 %v128, 0.0078125
  %v150 = vmul.f32 %v130, 0.0078125
  %v151 = vmul.f32 %v132, 0.0078125
  %v152 = vmul.f32 %v134, 0.0078125
  %v153 = vmul.f32 %v136, 0.0078125
  %v154 = vmul.f32 %v138, 0.0078125
  %v155 = vadd.f32 %v139, 1e-08
  %v156 = vadd.f32 %v140, 1e-08
  %v157 = vadd.f32 %v141, 1e-08
  %v158 = vadd.f32 %v142, 1e-08
  %v159 = vadd.f32 %v143, 1e-08
  %v160 = vadd.f32 %v144, 1e-08
  %v161 = vadd.f32 %v145, 1e-08
  %v162 = vadd.f32 %v146, 1e-08
  %v163 = vadd.f32 %v147, 1e-08
  %v164 = vadd.f32 %v148, 1e-08
  %v165 = vadd.f32 %v149, 1e-08
  %v166 = vadd.f32 %v150, 1e-08
  %v167 = vadd.f32 %v151, 1e-08
  %v168 = vadd.f32 %v152, 1e-08
  %v169 = vadd.f32 %v153, 1e-08
  %v170 = vadd.f32 %v154, 1e-08
  %v171 = vrsqrt.pop %v155
  %v172 = vmul.f32 %v171, %v155
  %v173 = vmul.f32 %v172, %v171
  %v174 = vmul.f32 0.5, %v173
  %v175 = vsub.f32 1.5, %v174
  %v176 = vmul.f32 %v171, %v175
  %vm177 = vweird.f32 %v155
  %vm178 = vweird.f32 %v171
  %vm179 = vmor %vm177, %vm178
  %v180 = vsel %vm179, %v171, %v176
  %v181 = vrsqrt.pop %v156
  %v182 = vmul.f32 %v181, %v156
  %v183 = vmul.f32 %v182, %v181
  %v184 = vmul.f32 0.5, %v183
  %v185 = vsub.f32 1.5, %v184
  %v186 = vmul.f32 %v181, %v185
  %vm187 = vweird.f32 %v156
  %vm188 = vweird.f32 %v181
  %vm189 = vmor %vm187, %vm188
  %v190 = vsel %vm189, %v181, %v186
  %v191 = vrsqrt.pop %v157
  %v192 = vmul.f32 %v191, %v157
  %v193 = vmul.f32 %v192, %v191
  %v194 = vmul.f32 0.5, %v193
  %v195 = vsub.f32 1.5, %v194
  %v196 = vmul.f32 %v191, %v195
  %vm197 = vweird.f32 %v157
  %vm198 = vweird.f32 %v191
  %vm199 = vmor %vm197, %vm198
  %v200 = vsel %vm199, %v191, %v196
  %v201 = vrsqrt.pop %v158
  %v202 = vmul.f32 %v201, %v158
  %v203 = vmul.f32 %v202, %v201
  %v204 = vmul.f32 0.5, %v203
  %v205 = vsub.f32 1.5, %v204
  %v206 = vmul.f32 %v201, %v205
  %vm207 = vweird.f32 %v158
  %vm208 = vweird.f32 %v201
  %vm209 = vmor %vm207, %vm208
  %v210 = vsel %vm209, %v201, %v206
  %v211 = vrsqrt.pop %v159
  %v212 = vmul.f32 %v211, %v159
  %v213 = vmul.f32 %v212, %v211
  %v214 = vmul.f32 0.5, %v213
  %v215 = vsub.f32 1.5, %v214
  %v216 = vmul.f32 %v211, %v215
  %vm217 = vweird.f32 %v159
  %vm218 = vweird.f32 %v211
  %vm219 = vmor %vm217, %vm218
  %v220 = vsel %vm219, %v211, %v216
  %v221 = vrsqrt.pop %v160
  %v222 = vmul.f32 %v221, %v160
  %v223 = vmul.f32 %v222, %v221
  %v224 = vmul.f32 0.5, %v223
  %v225 = vsub.f32 1.5, %v224
  %v226 = vmul.f32 %v221, %v225
  %vm227 = vweird.f32 %v160
  %vm228 = vweird.f32 %v221
  %vm229 = vmor %vm227, %vm228
  %v230 = vsel %vm229, %v221, %v226
  %v231 = vrsqrt.pop %v161
  %v232 = vmul.f32 %v231, %v161
  %v233 = vmul.f32 %v232, %v231
  %v234 = vmul.f32 0.5, %v233
  %v235 = vsub.f32 1.5, %v234
  %v236 = vmul.f32 %v231, %v235
  %vm237 = vweird.f32 %v161
  %vm238 = vweird.f32 %v231
  %vm239 = vmor %vm237, %vm238
  %v240 = vsel %vm239, %v231, %v236
  %v241 = vrsqrt.pop %v162
  %v242 = vmul.f32 %v241, %v162
  %v243 = vmul.f32 %v242, %v241
  %v244 = vmul.f32 0.5, %v243
  %v245 = vsub.f32 1.5, %v244
  %v246 = vmul.f32 %v241, %v245
  %vm247 = vweird.f32 %v162
  %vm248 = vweird.f32 %v241
  %vm249 = vmor %vm247, %vm248
  %v250 = vsel %vm249, %v241, %v246
  %v251 = vrsqrt.pop %v163
  %v252 = vmul.f32 %v251, %v163
  %v253 = vmul.f32 %v252, %v251
  %v254 = vmul.f32 0.5, %v253
  %v255 = vsub.f32 1.5, %v254
  %v256 = vmul.f32 %v251, %v255
  %vm257 = vweird.f32 %v163
  %vm258 = vweird.f32 %v251
  %vm259 = vmor %vm257, %vm258
  %v260 = vsel %vm259, %v251, %v256
  %v261 = vrsqrt.pop %v164
  %v262 = vmul.f32 %v261, %v164
  %v263 = vmul.f32 %v262, %v261
  %v264 = vmul.f32 0.5, %v263
  %v265 = vsub.f32 1.5, %v264
  %v266 = vmul.f32 %v261, %v265
  %vm267 = vweird.f32 %v164
  %vm268 = vweird.f32 %v261
  %vm269 = vmor %vm267, %vm268
  %v270 = vsel %vm269, %v261, %v266
  %v271 = vrsqrt.pop %v165
  %v272 = vmul.f32 %v271, %v165
  %v273 = vmul.f32 %v272, %v271
  %v274 = vmul.f32 0.5, %v273
  %v275 = vsub.f32 1.5, %v274
  %v276 = vmul.f32 %v271, %v275
  %vm277 = vweird.f32 %v165
  %vm278 = vweird.f32 %v271
  %vm279 = vmor %vm277, %vm278
  %v280 = vsel %vm279, %v271, %v276
  %v281 = vrsqrt.pop %v166
  %v282 = vmul.f32 %v281, %v166
  %v283 = vmul.f32 %v282, %v281
  %v284 = vmul.f32 0.5, %v283
  %v285 = vsub.f32 1.5, %v284
  %v286 = vmul.f32 %v281, %v285
  %vm287 = vweird.f32 %v166
  %vm288 = vweird.f32 %v281
  %vm289 = vmor %vm287, %vm288
  %v290 = vsel %vm289, %v281, %v286
  %v291 = vrsqrt.pop %v167
  %v292 = vmul.f32 %v291, %v167
  %v293 = vmul.f32 %v292, %v291
  %v294 = vmul.f32 0.5, %v293
  %v295 = vsub.f32 1.5, %v294
  %v296 = vmul.f32 %v291, %v295
  %vm297 = vweird.f32 %v167
  %vm298 = vweird.f32 %v291
  %vm299 = vmor %vm297, %vm298
  %v300 = vsel %vm299, %v291, %v296
  %v301 = vrsqrt.pop %v168
  %v302 = vmul.f32 %v301, %v168
  %v303 = vmul.f32 %v302, %v301
  %v304 = vmul.f32 0.5, %v303
  %v305 = vsub.f32 1.5, %v304
  %v306 = vmul.f32 %v301, %v305
  %vm307 = vweird.f32 %v168
  %vm308 = vweird.f32 %v301
  %vm309 = vmor %vm307, %vm308
  %v310 = vsel %vm309, %v301, %v306
  %v311 = vrsqrt.pop %v169
  %v312 = vmul.f32 %v311, %v169
  %v313 = vmul.f32 %v312, %v311
  %v314 = vmul.f32 0.5, %v313
  %v315 = vsub.f32 1.5, %v314
  %v316 = vmul.f32 %v311, %v315
  %vm317 = vweird.f32 %v169
  %vm318 = vweird.f32 %v311
  %vm319 = vmor %vm317, %vm318
  %v320 = vsel %vm319, %v311, %v316
  %v321 = vrsqrt.pop %v170
  %v322 = vmul.f32 %v321, %v170
  %v323 = vmul.f32 %v322, %v321
  %v324 = vmul.f32 0.5, %v323
  %v325 = vsub.f32 1.5, %v324
  %v326 = vmul.f32 %v321, %v325
  %vm327 = vweird.f32 %v170
  %vm328 = vweird.f32 %v321
  %vm329 = vmor %vm327, %vm328
  %v330 = vsel %vm329, %v321, %v326
  %v331 = vmul.f32 %v75, %v180
  %v332 = vmul.f32 %v76, %v190
  %v333 = vmul.f32 %v77, %v200
  %v334 = vmul.f32 %v78, %v210
  %v335 = vmul.f32 %v79, %v220
  %v336 = vmul.f32 %v80, %v230
  %v337 = vmul.f32 %v81, %v240
  %v338 = vmul.f32 %v82, %v250
  %v339 = vmul.f32 %v83, %v260
  %v340 = vmul.f32 %v84, %v270
  %v341 = vmul.f32 %v85, %v280
  %v342 = vmul.f32 %v86, %v290
  %v343 = vmul.f32 %v87, %v300
  %v344 = vmul.f32 %v88, %v310
  %v345 = vmul.f32 %v89, %v320
  %v346 = vmul.f32 %v90, %v330
  %v347 = vld [vmem:[%s1] sm:$0xff]
  %v348 = vld [vmem:[%s1 + $0x8] sm:$0xff]
  %v349 = vld [vmem:[%s1 + $0x10] sm:$0xff]
  %v350 = vld [vmem:[%s1 + $0x18] sm:$0xff]
  %v351 = vld [vmem:[%s1 + $0x20] sm:$0xff]
  %v352 = vld [vmem:[%s1 + $0x28] sm:$0xff]
  %v353 = vld [vmem:[%s1 + $0x30] sm:$0xff]
  %v354 = vld [vmem:[%s1 + $0x38] sm:$0xff]
  %v355 = vld [vmem:[%s1 + $0x40] sm:$0xff]
  %v356 = vld [vmem:[%s1 + $0x48] sm:$0xff]
  %v357 = vld [vmem:[%s1 + $0x50] sm:$0xff]
  %v358 = vld [vmem:[%s1 + $0x58] sm:$0xff]
  %v359 = vld [vmem:[%s1 + $0x60] sm:$0xff]
  %v360 = vld [vmem:[%s1 + $0x68] sm:$0xff]
  %v361 = vld [vmem:[%s1 + $0x70] sm:$0xff]
  %v362 = vld [vmem:[%s1 + $0x78] sm:$0xff]
  %v363 = vadd.f32 %v331, %v347
  %v364 = vadd.f32 %v332, %v348
  %v365 = vadd.f32 %v333, %v349
  %v366 = vadd.f32 %v334, %v350
  %v367 = vadd.f32 %v335, %v351
  %v368 = vadd.f32 %v336, %v352
  %v369 = vadd.f32 %v337, %v353
  %v370 = vadd.f32 %v338, %v354
  %v371 = vadd.f32 %v339, %v355
  %v372 = vadd.f32 %v340, %v356
  %v373 = vadd.f32 %v341, %v357
  %v374 = vadd.f32 %v342, %v358
  %v375 = vadd.f32 %v343, %v359
  %v376 = vadd.f32 %v344, %v360
  %v377 = vadd.f32 %v345, %v361
  %v378 = vadd.f32 %v346, %v362
  %379 = vst [vmem:[%s2] sm:$0xff] %v363
  %380 = vst [vmem:[%s2 + $0x8] sm:$0xff] %v364
  %381 = vst [vmem:[%s2 + $0x10] sm:$0xff] %v365
  %382 = vst [vmem:[%s2 + $0x18] sm:$0xff] %v366
  %383 = vst [vmem:[%s2 + $0x20] sm:$0xff] %v367
  %384 = vst [vmem:[%s2 + $0x28] sm:$0xff] %v368
  %385 = vst [vmem:[%s2 + $0x30] sm:$0xff] %v369
  %386 = vst [vmem:[%s2 + $0x38] sm:$0xff] %v370
  %387 = vst [vmem:[%s2 + $0x40] sm:$0xff] %v371
  %388 = vst [vmem:[%s2 + $0x48] sm:$0xff] %v372
  %389 = vst [vmem:[%s2 + $0x50] sm:$0xff] %v373
  %390 = vst [vmem:[%s2 + $0x58] sm:$0xff] %v374
  %391 = vst [vmem:[%s2 + $0x60] sm:$0xff] %v375
  %392 = vst [vmem:[%s2 + $0x68] sm:$0xff] %v376
  %393 = vst [vmem:[%s2 + $0x70] sm:$0xff] %v377
  %394 = vst [vmem:[%s2 + $0x78] sm:$0xff] %v378
  // Predicated region
  $region10: #{dprnn_forward.15} parent=0 // pred_check
    _
  $region11: #{dprnn_forward.15} parent=0 // pred_check_branch
    %396 = sbr.rel (0) target = $region13
  $region12: #{dprnn_forward.15} parent=0 // pred_region
    _
  $region13: #{dprnn_forward.15} parent=0 // pred_fallthru
    _
  // Predicated region
  $region14: #{dprnn_forward.15} parent=0 // pred_check
    _
  $region15: #{dprnn_forward.15} parent=0 // pred_check_branch
    %398 = sbr.rel (0) target = $region17
  $region16: #{dprnn_forward.15} parent=0 // pred_region
    _
  $region17: #{dprnn_forward.15} parent=0 // pred_fallthru
    _

</llo_original>
